<compile_context>
chip_gen: v7x
topology: tpu7x:2x2x1
jax: 0.10.0
libtpu: 0.0.40
codegen_flags: <defaults>
</compile_context>

<pallas_src>
import functools

import jax
import jax.numpy as jnp
from jax.experimental import pallas as pl
from jax.experimental.pallas import tpu as pltpu


def _round_up(x, m):
    return ((x + m - 1) // m) * m


def _char_decoder_kernel(ids_ref, h0_ref, c0_ref, t_ref, w_hh_ref, b_ref,
                         w_out_ref, b_out_ref,
                         scores_ref, h_out_ref, c_out_ref,
                         *, L, Bp, H, Vp):
    # ---- in-kernel embedding + input projection ----
    # T = emb @ W_ih (precomputed at init, zero-padded to (Vp, 4H)). A one-hot matmul
    # replaces both the XLA embedding gather and the hoisted (L*Bp, E) @ (E, 4H) matmul.
    ids = ids_ref[...]                                            # (L*Bp, 1) int32
    onehot = (jax.lax.broadcasted_iota(jnp.int32, (L * Bp, Vp), 1)
              == ids).astype(jnp.float32)                         # (L*Bp, Vp)
    gx = (jnp.dot(onehot, t_ref[...], preferred_element_type=jnp.float32)
          + b_ref[...])                                           # (L*Bp, 4H)

    w_hh = w_hh_ref[...]     # (4H, 4H); rows [H, 4H) are zero
    w_out = w_out_ref[...]   # (4H, Vp); rows [H, 4H) are zero
    b_out = b_out_ref[...]   # (1, Vp)
    h = h0_ref[...]          # (Bp, 4H); only lanes [0, H) are meaningful
    c = c0_ref[...]          # (Bp, 4H); only lanes [0, H) are meaningful

    # ---- sequential LSTM recurrence, fully unrolled (L small & static) ----
    # Correctness invariant: lanes [H, 4H) of h / c carry bounded "junk" (sigmoid/tanh
    # outputs only, so it stays finite), and the zero rows of w_hh / w_out guarantee
    # that junk never contributes to any matmul. Keep activations bounded if editing.
    # TODO(synk): latch W_hh in the MXU across the serial steps via
    # pltpu.matmul_push_rhs / matmul_acc_lhs / matmul_pop once the explicit-MXU path
    # is validated on all target generations (v5e/v6e/v7x).
    for t in range(L):
        gates = gx[t * Bp:(t + 1) * Bp, :] + jnp.dot(
            h, w_hh, preferred_element_type=jnp.float32)     # (Bp, 4H) = [i | f | g | o]
        sig = jax.nn.sigmoid(gates)            # whole-vreg EUP op
        th = jnp.tanh(gates)                   # whole-vreg EUP op
        # XLU lane rolls align the f / g / o chunks onto lanes [0, H)
        # (roll(x, s): out[j] = in[(j - s) mod 4H]).
        f_al = pltpu.roll(sig, 3 * H, 1)       # lanes [0,H) <- sigmoid(f)
        g_al = pltpu.roll(th, 2 * H, 1)        # lanes [0,H) <- tanh(g)
        o_al = pltpu.roll(sig, H, 1)           # lanes [0,H) <- sigmoid(o)
        c = f_al * c + sig * g_al              # lanes [0,H): f*c + i*g
        h = o_al * jnp.tanh(c)                 # lanes [0,H): o*tanh(c)
        # Fused vocab projection: hides under the next step's h -> gates dependency.
        scores_ref[t * Bp:(t + 1) * Bp, :] = (
            jnp.dot(h, w_out, preferred_element_type=jnp.float32) + b_out
        ).astype(scores_ref.dtype)             # tile-aligned, unmasked store

    h_out_ref[...] = h.astype(h_out_ref.dtype)
    c_out_ref[...] = c.astype(c_out_ref.dtype)


def prepare_char_decoder(params, batch_size):
    """One-time (init-time) padding / packing of the CharDecoder parameters."""
    emb = params["emb"].astype(jnp.float32)       # (V, E), row 0 zero (padding_idx=0)
    w_ih = params["w_ih"].astype(jnp.float32)     # (E, 4H)  == weight_ih_l0.T
    w_hh = params["w_hh"].astype(jnp.float32)     # (H, 4H)  == weight_hh_l0.T
    b = params["b"].astype(jnp.float32)           # (1, 4H)  == bias_ih + bias_hh
    w_out = params["w_out"].astype(jnp.float32)   # (H, V)   == proj weight.T
    b_out = params["b_out"].astype(jnp.float32)   # (1, V)

    V = emb.shape[0]
    H = w_hh.shape[0]
    G = 4 * H
    Bp = max(8, _round_up(batch_size, 8))         # full sublane tile
    Vp = _round_up(V, 128)                        # full lanes (lane-dense output)

    # Precomputed embedding * input-projection table: T[v] = emb[v] @ W_ih.
    T = emb @ w_ih                                                    # (V, 4H)
    T_p = jnp.zeros((Vp, G), jnp.float32).at[:V, :].set(T)
    # Zero-pad contraction rows so junk lanes of h never contribute to a matmul.
    w_hh_p = jnp.zeros((G, G), jnp.float32).at[:H, :].set(w_hh)
    w_out_p = jnp.zeros((G, Vp), jnp.float32).at[:H, :V].set(w_out)
    b_out_p = jnp.zeros((1, Vp), jnp.float32).at[:, :V].set(b_out)
    zero_state = jnp.zeros((Bp, G), jnp.float32)

    return dict(T_p=T_p, w_hh_p=w_hh_p, b=b, w_out_p=w_out_p, b_out_p=b_out_p,
                zero_state=zero_state,
                dims=dict(H=H, V=V, G=G, Bp=Bp, Vp=Vp))


def make_char_decoder_forward(params, batch_size):
    """Returns a jitted forward(input_ids, dec_hidden=None) mirroring CharDecoder.forward."""
    prepped = prepare_char_decoder(params, batch_size)
    d = prepped["dims"]
    H, V, G, Bp, Vp = d["H"], d["V"], d["G"], d["Bp"], d["Vp"]

    def _forward(input_ids, dec_hidden=None):
        L, B = input_ids.shape
        assert B <= Bp, "batch larger than the prepared padded batch"

        # Pad batch and flatten ids to a (L*Bp, 1) column (only per-call glue op).
        ids_p = jnp.zeros((L, Bp), jnp.int32).at[:, :B].set(
            input_ids.astype(jnp.int32)).reshape(L * Bp, 1)

        if dec_hidden is None:
            h0_p = prepped["zero_state"]
            c0_p = prepped["zero_state"]
        else:
            h0 = dec_hidden[0].reshape(B, H).astype(jnp.float32)
            c0 = dec_hidden[1].reshape(B, H).astype(jnp.float32)
            h0_p = jnp.pad(h0, ((0, Bp - B), (0, G - H)))
            c0_p = jnp.pad(c0, ((0, Bp - B), (0, G - H)))

        kernel = functools.partial(_char_decoder_kernel, L=L, Bp=Bp, H=H, Vp=Vp)
        vmem_specs = [pl.BlockSpec(memory_space=pltpu.MemorySpace.VMEM)
                      for _ in range(8)]
        out_specs = tuple(pl.BlockSpec(memory_space=pltpu.MemorySpace.VMEM)
                          for _ in range(3))

        # Single invocation (no grid): nothing to pipeline, no double-buffering.
        # TODO(synk): for large multi-sequence batches add a "parallel" grid axis over
        # sequence groups so v7x's second TensorCore gets work.
        scores_p, h_n_p, c_n_p = pl.pallas_call(
            kernel,
            out_shape=(
                jax.ShapeDtypeStruct((L * Bp, Vp), jnp.float32),
                jax.ShapeDtypeStruct((Bp, G), jnp.float32),
                jax.ShapeDtypeStruct((Bp, G), jnp.float32),
            ),
            in_specs=vmem_specs,
            out_specs=out_specs,
        )(ids_p, h0_p, c0_p, prepped["T_p"], prepped["w_hh_p"], prepped["b"],
          prepped["w_out_p"], prepped["b_out_p"])

        scores = scores_p.reshape(L, Bp, Vp)[:, :B, :V]
        h_n = h_n_p[:B, :H]
        c_n = c_n_p[:B, :H]
        return scores, (h_n[None], c_n[None])

    return jax.jit(_forward)


def _reference_forward(input_ids, params, dec_hidden=None):
    """Pure-JAX reference (lax.scan LSTM) for correctness checking."""
    L, B = input_ids.shape
    H = params["w_hh"].shape[0]
    x = params["emb"][input_ids]
    if dec_hidden is None:
        h0 = jnp.zeros((B, H), jnp.float32)
        c0 = jnp.zeros((B, H), jnp.float32)
    else:
        h0, c0 = dec_hidden[0][0], dec_hidden[1][0]

    def step(carry, x_t):
        h, c = carry
        gates = x_t @ params["w_ih"] + h @ params["w_hh"] + params["b"][0]
        i = jax.nn.sigmoid(gates[:, 0 * H:1 * H])
        f = jax.nn.sigmoid(gates[:, 1 * H:2 * H])
        g = jnp.tanh(gates[:, 2 * H:3 * H])
        o = jax.nn.sigmoid(gates[:, 3 * H:4 * H])
        c_new = f * c + i * g
        h_new = o * jnp.tanh(c_new)
        return (h_new, c_new), h_new

    (h_n, c_n), hs = jax.lax.scan(step, (h0, c0), x)
    scores = hs @ params["w_out"] + params["b_out"][0]
    return scores, (h_n[None], c_n[None])


def init_params(key, hidden_size, char_embedding_size, vocab_size):
    ks = jax.random.split(key, 6)
    scale = 0.1
    emb = scale * jax.random.normal(ks[0], (vocab_size, char_embedding_size), jnp.float32)
    emb = emb.at[0].set(0.0)  # padding_idx=0
    w_ih = scale * jax.random.normal(ks[1], (char_embedding_size, 4 * hidden_size), jnp.float32)
    w_hh = scale * jax.random.normal(ks[2], (hidden_size, 4 * hidden_size), jnp.float32)
    b = scale * jax.random.normal(ks[3], (1, 4 * hidden_size), jnp.float32)
    w_out = scale * jax.random.normal(ks[4], (hidden_size, vocab_size), jnp.float32)
    b_out = scale * jax.random.normal(ks[5], (1, vocab_size), jnp.float32)
    return dict(emb=emb, w_ih=w_ih, w_hh=w_hh, b=b, w_out=w_out, b_out=b_out)


if __name__ == "__main__":
    # small shapes consistent with the module: seq=8, batch=2, hidden=32,
    # char_embedding_size=50 (module default), char vocab=30.
    L, B, H, E, V = 8, 2, 32, 50, 30

    key = jax.random.PRNGKey(0)
    k_param, k_ids, k_h, k_c = jax.random.split(key, 4)
    params = init_params(k_param, H, E, V)

    forward = make_char_decoder_forward(params, batch_size=B)

    input_ids = jax.random.randint(k_ids, (L, B), 0, V, dtype=jnp.int32)
    dec_hidden = (0.1 * jax.random.normal(k_h, (1, B, H), jnp.float32),
                  0.1 * jax.random.normal(k_c, (1, B, H), jnp.float32))

    scores, (h_n, c_n) = forward(input_ids, dec_hidden)
    jax.block_until_ready((scores, h_n, c_n))

    # verify against pure-JAX reference
    ref_scores, (ref_h, ref_c) = _reference_forward(input_ids, params, dec_hidden)
    assert scores.shape == (L, B, V) and h_n.shape == (1, B, H) and c_n.shape == (1, B, H)
    assert jnp.allclose(scores, ref_scores, rtol=1e-4, atol=1e-4)
    assert jnp.allclose(h_n, ref_h, rtol=1e-4, atol=1e-4)
    assert jnp.allclose(c_n, ref_c, rtol=1e-4, atol=1e-4)

    # also check the no-initial-state path (dec_hidden=None)
    scores0, (h0n, c0n) = forward(input_ids)
    jax.block_until_ready((scores0, h0n, c0n))
    ref_scores0, (ref_h0, ref_c0) = _reference_forward(input_ids, params, None)
    assert jnp.allclose(scores0, ref_scores0, rtol=1e-4, atol=1e-4)
    assert jnp.allclose(h0n, ref_h0, rtol=1e-4, atol=1e-4)
    assert jnp.allclose(c0n, ref_c0, rtol=1e-4, atol=1e-4)

    print("KERNEL_OK")
</pallas_src>

<mosaic_0001>
module attributes {stable_mosaic.version = 11 : i64} {
  func.func @_char_decoder_kernel(%arg0: memref<64x1xi32, #tpu.memory_space<vmem>>, %arg1: memref<8x128xf32, #tpu.memory_space<vmem>>, %arg2: memref<8x128xf32, #tpu.memory_space<vmem>>, %arg3: memref<128x128xf32, #tpu.memory_space<vmem>>, %arg4: memref<128x128xf32, #tpu.memory_space<vmem>>, %arg5: memref<1x128xf32, #tpu.memory_space<vmem>>, %arg6: memref<128x128xf32, #tpu.memory_space<vmem>>, %arg7: memref<1x128xf32, #tpu.memory_space<vmem>>, %arg8: memref<64x128xf32, #tpu.memory_space<vmem>>, %arg9: memref<8x128xf32, #tpu.memory_space<vmem>>, %arg10: memref<8x128xf32, #tpu.memory_space<vmem>>) attributes {dimension_semantics = [], scalar_prefetch = 0 : i64, scratch_operands = 0 : i64, tpu.core_type = #tpu.core_type<tc>} {
    %c0 = arith.constant 0 : index
    %c0_0 = arith.constant 0 : index
    %0 = vector.load %arg0[%c0, %c0_0] : memref<64x1xi32, #tpu.memory_space<vmem>>, vector<64x1xi32>
    %1 = tpu.iota {dimensions = array<i32: 1>} : vector<64x128xi32>
    %2 = vector.broadcast %0 : vector<64x1xi32> to vector<64x128xi32>
    %3 = arith.cmpi eq, %1, %2 : vector<64x128xi32>
    %4 = arith.extui %3 : vector<64x128xi1> to vector<64x128xi32>
    %5 = arith.sitofp %4 : vector<64x128xi32> to vector<64x128xf32>
    %c0_1 = arith.constant 0 : index
    %c0_2 = arith.constant 0 : index
    %6 = vector.load %arg3[%c0_1, %c0_2] : memref<128x128xf32, #tpu.memory_space<vmem>>, vector<128x128xf32>
    %cst = arith.constant dense<0.000000e+00> : vector<64x128xf32>
    %7 = tpu.matmul %5, %6, %cst {dimension_numbers = #tpu.dot_dimension_numbers<[1], [0], [0], [1], [0, 0, 1, 1], [], []>} : vector<64x128xf32>, vector<128x128xf32>, vector<64x128xf32> -> vector<64x128xf32>
    %c0_3 = arith.constant 0 : index
    %c0_4 = arith.constant 0 : index
    %8 = vector.load %arg5[%c0_3, %c0_4] : memref<1x128xf32, #tpu.memory_space<vmem>>, vector<1x128xf32>
    %9 = vector.broadcast %8 : vector<1x128xf32> to vector<64x128xf32>
    %10 = arith.addf %7, %9 : vector<64x128xf32>
    %c0_5 = arith.constant 0 : index
    %c0_6 = arith.constant 0 : index
    %11 = vector.load %arg4[%c0_5, %c0_6] : memref<128x128xf32, #tpu.memory_space<vmem>>, vector<128x128xf32>
    %c0_7 = arith.constant 0 : index
    %c0_8 = arith.constant 0 : index
    %12 = vector.load %arg6[%c0_7, %c0_8] : memref<128x128xf32, #tpu.memory_space<vmem>>, vector<128x128xf32>
    %c0_9 = arith.constant 0 : index
    %c0_10 = arith.constant 0 : index
    %13 = vector.load %arg7[%c0_9, %c0_10] : memref<1x128xf32, #tpu.memory_space<vmem>>, vector<1x128xf32>
    %c0_11 = arith.constant 0 : index
    %c0_12 = arith.constant 0 : index
    %14 = vector.load %arg1[%c0_11, %c0_12] : memref<8x128xf32, #tpu.memory_space<vmem>>, vector<8x128xf32>
    %c0_13 = arith.constant 0 : index
    %c0_14 = arith.constant 0 : index
    %15 = vector.load %arg2[%c0_13, %c0_14] : memref<8x128xf32, #tpu.memory_space<vmem>>, vector<8x128xf32>
    %16 = vector.extract_strided_slice %10 {offsets = [0, 0], sizes = [8, 128], strides = [1, 1]} : vector<64x128xf32> to vector<8x128xf32>
    %cst_15 = arith.constant dense<0.000000e+00> : vector<8x128xf32>
    %17 = tpu.matmul %14, %11, %cst_15 {dimension_numbers = #tpu.dot_dimension_numbers<[1], [0], [0], [1], [0, 0, 1, 1], [], []>} : vector<8x128xf32>, vector<128x128xf32>, vector<8x128xf32> -> vector<8x128xf32>
    %18 = arith.addf %16, %17 : vector<8x128xf32>
    %19 = arith.negf %18 : vector<8x128xf32>
    %20 = math.exp %19 : vector<8x128xf32>
    %cst_16 = arith.constant 1.000000e+00 : f32
    %21 = vector.broadcast %cst_16 : f32 to vector<8x128xf32>
    %22 = arith.addf %21, %20 : vector<8x128xf32>
    %23 = arith.divf %21, %22 : vector<8x128xf32>
    %24 = math.tanh %18 : vector<8x128xf32>
    %c96_i32 = arith.constant 96 : i32
    %25 = tpu.dynamic_rotate %23 by %c96_i32 dim 1 : vector<8x128xf32>, i32 -> vector<8x128xf32>
    %c64_i32 = arith.constant 64 : i32
    %26 = tpu.dynamic_rotate %24 by %c64_i32 dim 1 : vector<8x128xf32>, i32 -> vector<8x128xf32>
    %c32_i32 = arith.constant 32 : i32
    %27 = tpu.dynamic_rotate %23 by %c32_i32 dim 1 : vector<8x128xf32>, i32 -> vector<8x128xf32>
    %28 = arith.mulf %25, %15 : vector<8x128xf32>
    %29 = arith.mulf %23, %26 : vector<8x128xf32>
    %30 = arith.addf %28, %29 : vector<8x128xf32>
    %31 = math.tanh %30 : vector<8x128xf32>
    %32 = arith.mulf %27, %31 : vector<8x128xf32>
    %cst_17 = arith.constant dense<0.000000e+00> : vector<8x128xf32>
    %33 = tpu.matmul %32, %12, %cst_17 {dimension_numbers = #tpu.dot_dimension_numbers<[1], [0], [0], [1], [0, 0, 1, 1], [], []>} : vector<8x128xf32>, vector<128x128xf32>, vector<8x128xf32> -> vector<8x128xf32>
    %34 = vector.broadcast %13 : vector<1x128xf32> to vector<8x128xf32>
    %35 = arith.addf %33, %34 : vector<8x128xf32>
    %c0_18 = arith.constant 0 : index
    %c0_19 = arith.constant 0 : index
    %36 = vector.load %arg8[%c0_18, %c0_19] : memref<64x128xf32, #tpu.memory_space<vmem>>, vector<8x128xf32>
    tpu.vector_store %arg8[%c0_18, %c0_19], %35 {strides = array<i32>} : memref<64x128xf32, #tpu.memory_space<vmem>>, vector<8x128xf32>,
    %37 = vector.extract_strided_slice %10 {offsets = [8, 0], sizes = [8, 128], strides = [1, 1]} : vector<64x128xf32> to vector<8x128xf32>
    %cst_20 = arith.constant dense<0.000000e+00> : vector<8x128xf32>
    %38 = tpu.matmul %32, %11, %cst_20 {dimension_numbers = #tpu.dot_dimension_numbers<[1], [0], [0], [1], [0, 0, 1, 1], [], []>} : vector<8x128xf32>, vector<128x128xf32>, vector<8x128xf32> -> vector<8x128xf32>
    %39 = arith.addf %37, %38 : vector<8x128xf32>
    %40 = arith.negf %39 : vector<8x128xf32>
    %41 = math.exp %40 : vector<8x128xf32>
    %cst_21 = arith.constant 1.000000e+00 : f32
    %42 = vector.broadcast %cst_21 : f32 to vector<8x128xf32>
    %43 = arith.addf %42, %41 : vector<8x128xf32>
    %44 = arith.divf %42, %43 : vector<8x128xf32>
    %45 = math.tanh %39 : vector<8x128xf32>
    %c96_i32_22 = arith.constant 96 : i32
    %46 = tpu.dynamic_rotate %44 by %c96_i32_22 dim 1 : vector<8x128xf32>, i32 -> vector<8x128xf32>
    %c64_i32_23 = arith.constant 64 : i32
    %47 = tpu.dynamic_rotate %45 by %c64_i32_23 dim 1 : vector<8x128xf32>, i32 -> vector<8x128xf32>
    %c32_i32_24 = arith.constant 32 : i32
    %48 = tpu.dynamic_rotate %44 by %c32_i32_24 dim 1 : vector<8x128xf32>, i32 -> vector<8x128xf32>
    %49 = arith.mulf %46, %30 : vector<8x128xf32>
    %50 = arith.mulf %44, %47 : vector<8x128xf32>
    %51 = arith.addf %49, %50 : vector<8x128xf32>
    %52 = math.tanh %51 : vector<8x128xf32>
    %53 = arith.mulf %48, %52 : vector<8x128xf32>
    %cst_25 = arith.constant dense<0.000000e+00> : vector<8x128xf32>
    %54 = tpu.matmul %53, %12, %cst_25 {dimension_numbers = #tpu.dot_dimension_numbers<[1], [0], [0], [1], [0, 0, 1, 1], [], []>} : vector<8x128xf32>, vector<128x128xf32>, vector<8x128xf32> -> vector<8x128xf32>
    %55 = vector.broadcast %13 : vector<1x128xf32> to vector<8x128xf32>
    %56 = arith.addf %54, %55 : vector<8x128xf32>
    %c8 = arith.constant 8 : index
    %c0_26 = arith.constant 0 : index
    %57 = vector.load %arg8[%c8, %c0_26] : memref<64x128xf32, #tpu.memory_space<vmem>>, vector<8x128xf32>
    tpu.vector_store %arg8[%c8, %c0_26], %56 {strides = array<i32>} : memref<64x128xf32, #tpu.memory_space<vmem>>, vector<8x128xf32>,
    %58 = vector.extract_strided_slice %10 {offsets = [16, 0], sizes = [8, 128], strides = [1, 1]} : vector<64x128xf32> to vector<8x128xf32>
    %cst_27 = arith.constant dense<0.000000e+00> : vector<8x128xf32>
    %59 = tpu.matmul %53, %11, %cst_27 {dimension_numbers = #tpu.dot_dimension_numbers<[1], [0], [0], [1], [0, 0, 1, 1], [], []>} : vector<8x128xf32>, vector<128x128xf32>, vector<8x128xf32> -> vector<8x128xf32>
    %60 = arith.addf %58, %59 : vector<8x128xf32>
    %61 = arith.negf %60 : vector<8x128xf32>
    %62 = math.exp %61 : vector<8x128xf32>
    %cst_28 = arith.constant 1.000000e+00 : f32
    %63 = vector.broadcast %cst_28 : f32 to vector<8x128xf32>
    %64 = arith.addf %63, %62 : vector<8x128xf32>
    %65 = arith.divf %63, %64 : vector<8x128xf32>
    %66 = math.tanh %60 : vector<8x128xf32>
    %c96_i32_29 = arith.constant 96 : i32
    %67 = tpu.dynamic_rotate %65 by %c96_i32_29 dim 1 : vector<8x128xf32>, i32 -> vector<8x128xf32>
    %c64_i32_30 = arith.constant 64 : i32
    %68 = tpu.dynamic_rotate %66 by %c64_i32_30 dim 1 : vector<8x128xf32>, i32 -> vector<8x128xf32>
    %c32_i32_31 = arith.constant 32 : i32
    %69 = tpu.dynamic_rotate %65 by %c32_i32_31 dim 1 : vector<8x128xf32>, i32 -> vector<8x128xf32>
    %70 = arith.mulf %67, %51 : vector<8x128xf32>
    %71 = arith.mulf %65, %68 : vector<8x128xf32>
    %72 = arith.addf %70, %71 : vector<8x128xf32>
    %73 = math.tanh %72 : vector<8x128xf32>
    %74 = arith.mulf %69, %73 : vector<8x128xf32>
    %cst_32 = arith.constant dense<0.000000e+00> : vector<8x128xf32>
    %75 = tpu.matmul %74, %12, %cst_32 {dimension_numbers = #tpu.dot_dimension_numbers<[1], [0], [0], [1], [0, 0, 1, 1], [], []>} : vector<8x128xf32>, vector<128x128xf32>, vector<8x128xf32> -> vector<8x128xf32>
    %76 = vector.broadcast %13 : vector<1x128xf32> to vector<8x128xf32>
    %77 = arith.addf %75, %76 : vector<8x128xf32>
    %c16 = arith.constant 16 : index
    %c0_33 = arith.constant 0 : index
    %78 = vector.load %arg8[%c16, %c0_33] : memref<64x128xf32, #tpu.memory_space<vmem>>, vector<8x128xf32>
    tpu.vector_store %arg8[%c16, %c0_33], %77 {strides = array<i32>} : memref<64x128xf32, #tpu.memory_space<vmem>>, vector<8x128xf32>,
    %79 = vector.extract_strided_slice %10 {offsets = [24, 0], sizes = [8, 128], strides = [1, 1]} : vector<64x128xf32> to vector<8x128xf32>
    %cst_34 = arith.constant dense<0.000000e+00> : vector<8x128xf32>
    %80 = tpu.matmul %74, %11, %cst_34 {dimension_numbers = #tpu.dot_dimension_numbers<[1], [0], [0], [1], [0, 0, 1, 1], [], []>} : vector<8x128xf32>, vector<128x128xf32>, vector<8x128xf32> -> vector<8x128xf32>
    %81 = arith.addf %79, %80 : vector<8x128xf32>
    %82 = arith.negf %81 : vector<8x128xf32>
    %83 = math.exp %82 : vector<8x128xf32>
    %cst_35 = arith.constant 1.000000e+00 : f32
    %84 = vector.broadcast %cst_35 : f32 to vector<8x128xf32>
    %85 = arith.addf %84, %83 : vector<8x128xf32>
    %86 = arith.divf %84, %85 : vector<8x128xf32>
    %87 = math.tanh %81 : vector<8x128xf32>
    %c96_i32_36 = arith.constant 96 : i32
    %88 = tpu.dynamic_rotate %86 by %c96_i32_36 dim 1 : vector<8x128xf32>, i32 -> vector<8x128xf32>
    %c64_i32_37 = arith.constant 64 : i32
    %89 = tpu.dynamic_rotate %87 by %c64_i32_37 dim 1 : vector<8x128xf32>, i32 -> vector<8x128xf32>
    %c32_i32_38 = arith.constant 32 : i32
    %90 = tpu.dynamic_rotate %86 by %c32_i32_38 dim 1 : vector<8x128xf32>, i32 -> vector<8x128xf32>
    %91 = arith.mulf %88, %72 : vector<8x128xf32>
    %92 = arith.mulf %86, %89 : vector<8x128xf32>
    %93 = arith.addf %91, %92 : vector<8x128xf32>
    %94 = math.tanh %93 : vector<8x128xf32>
    %95 = arith.mulf %90, %94 : vector<8x128xf32>
    %cst_39 = arith.constant dense<0.000000e+00> : vector<8x128xf32>
    %96 = tpu.matmul %95, %12, %cst_39 {dimension_numbers = #tpu.dot_dimension_numbers<[1], [0], [0], [1], [0, 0, 1, 1], [], []>} : vector<8x128xf32>, vector<128x128xf32>, vector<8x128xf32> -> vector<8x128xf32>
    %97 = vector.broadcast %13 : vector<1x128xf32> to vector<8x128xf32>
    %98 = arith.addf %96, %97 : vector<8x128xf32>
    %c24 = arith.constant 24 : index
    %c0_40 = arith.constant 0 : index
    %99 = vector.load %arg8[%c24, %c0_40] : memref<64x128xf32, #tpu.memory_space<vmem>>, vector<8x128xf32>
    tpu.vector_store %arg8[%c24, %c0_40], %98 {strides = array<i32>} : memref<64x128xf32, #tpu.memory_space<vmem>>, vector<8x128xf32>,
    %100 = vector.extract_strided_slice %10 {offsets = [32, 0], sizes = [8, 128], strides = [1, 1]} : vector<64x128xf32> to vector<8x128xf32>
    %cst_41 = arith.constant dense<0.000000e+00> : vector<8x128xf32>
    %101 = tpu.matmul %95, %11, %cst_41 {dimension_numbers = #tpu.dot_dimension_numbers<[1], [0], [0], [1], [0, 0, 1, 1], [], []>} : vector<8x128xf32>, vector<128x128xf32>, vector<8x128xf32> -> vector<8x128xf32>
    %102 = arith.addf %100, %101 : vector<8x128xf32>
    %103 = arith.negf %102 : vector<8x128xf32>
    %104 = math.exp %103 : vector<8x128xf32>
    %cst_42 = arith.constant 1.000000e+00 : f32
    %105 = vector.broadcast %cst_42 : f32 to vector<8x128xf32>
    %106 = arith.addf %105, %104 : vector<8x128xf32>
    %107 = arith.divf %105, %106 : vector<8x128xf32>
    %108 = math.tanh %102 : vector<8x128xf32>
    %c96_i32_43 = arith.constant 96 : i32
    %109 = tpu.dynamic_rotate %107 by %c96_i32_43 dim 1 : vector<8x128xf32>, i32 -> vector<8x128xf32>
    %c64_i32_44 = arith.constant 64 : i32
    %110 = tpu.dynamic_rotate %108 by %c64_i32_44 dim 1 : vector<8x128xf32>, i32 -> vector<8x128xf32>
    %c32_i32_45 = arith.constant 32 : i32
    %111 = tpu.dynamic_rotate %107 by %c32_i32_45 dim 1 : vector<8x128xf32>, i32 -> vector<8x128xf32>
    %112 = arith.mulf %109, %93 : vector<8x128xf32>
    %113 = arith.mulf %107, %110 : vector<8x128xf32>
    %114 = arith.addf %112, %113 : vector<8x128xf32>
    %115 = math.tanh %114 : vector<8x128xf32>
    %116 = arith.mulf %111, %115 : vector<8x128xf32>
    %cst_46 = arith.constant dense<0.000000e+00> : vector<8x128xf32>
    %117 = tpu.matmul %116, %12, %cst_46 {dimension_numbers = #tpu.dot_dimension_numbers<[1], [0], [0], [1], [0, 0, 1, 1], [], []>} : vector<8x128xf32>, vector<128x128xf32>, vector<8x128xf32> -> vector<8x128xf32>
    %118 = vector.broadcast %13 : vector<1x128xf32> to vector<8x128xf32>
    %119 = arith.addf %117, %118 : vector<8x128xf32>
    %c32 = arith.constant 32 : index
    %c0_47 = arith.constant 0 : index
    %120 = vector.load %arg8[%c32, %c0_47] : memref<64x128xf32, #tpu.memory_space<vmem>>, vector<8x128xf32>
    tpu.vector_store %arg8[%c32, %c0_47], %119 {strides = array<i32>} : memref<64x128xf32, #tpu.memory_space<vmem>>, vector<8x128xf32>,
    %121 = vector.extract_strided_slice %10 {offsets = [40, 0], sizes = [8, 128], strides = [1, 1]} : vector<64x128xf32> to vector<8x128xf32>
    %cst_48 = arith.constant dense<0.000000e+00> : vector<8x128xf32>
    %122 = tpu.matmul %116, %11, %cst_48 {dimension_numbers = #tpu.dot_dimension_numbers<[1], [0], [0], [1], [0, 0, 1, 1], [], []>} : vector<8x128xf32>, vector<128x128xf32>, vector<8x128xf32> -> vector<8x128xf32>
    %123 = arith.addf %121, %122 : vector<8x128xf32>
    %124 = arith.negf %123 : vector<8x128xf32>
    %125 = math.exp %124 : vector<8x128xf32>
    %cst_49 = arith.constant 1.000000e+00 : f32
    %126 = vector.broadcast %cst_49 : f32 to vector<8x128xf32>
    %127 = arith.addf %126, %125 : vector<8x128xf32>
    %128 = arith.divf %126, %127 : vector<8x128xf32>
    %129 = math.tanh %123 : vector<8x128xf32>
    %c96_i32_50 = arith.constant 96 : i32
    %130 = tpu.dynamic_rotate %128 by %c96_i32_50 dim 1 : vector<8x128xf32>, i32 -> vector<8x128xf32>
    %c64_i32_51 = arith.constant 64 : i32
    %131 = tpu.dynamic_rotate %129 by %c64_i32_51 dim 1 : vector<8x128xf32>, i32 -> vector<8x128xf32>
    %c32_i32_52 = arith.constant 32 : i32
    %132 = tpu.dynamic_rotate %128 by %c32_i32_52 dim 1 : vector<8x128xf32>, i32 -> vector<8x128xf32>
    %133 = arith.mulf %130, %114 : vector<8x128xf32>
    %134 = arith.mulf %128, %131 : vector<8x128xf32>
    %135 = arith.addf %133, %134 : vector<8x128xf32>
    %136 = math.tanh %135 : vector<8x128xf32>
    %137 = arith.mulf %132, %136 : vector<8x128xf32>
    %cst_53 = arith.constant dense<0.000000e+00> : vector<8x128xf32>
    %138 = tpu.matmul %137, %12, %cst_53 {dimension_numbers = #tpu.dot_dimension_numbers<[1], [0], [0], [1], [0, 0, 1, 1], [], []>} : vector<8x128xf32>, vector<128x128xf32>, vector<8x128xf32> -> vector<8x128xf32>
    %139 = vector.broadcast %13 : vector<1x128xf32> to vector<8x128xf32>
    %140 = arith.addf %138, %139 : vector<8x128xf32>
    %c40 = arith.constant 40 : index
    %c0_54 = arith.constant 0 : index
    %141 = vector.load %arg8[%c40, %c0_54] : memref<64x128xf32, #tpu.memory_space<vmem>>, vector<8x128xf32>
    tpu.vector_store %arg8[%c40, %c0_54], %140 {strides = array<i32>} : memref<64x128xf32, #tpu.memory_space<vmem>>, vector<8x128xf32>,
    %142 = vector.extract_strided_slice %10 {offsets = [48, 0], sizes = [8, 128], strides = [1, 1]} : vector<64x128xf32> to vector<8x128xf32>
    %cst_55 = arith.constant dense<0.000000e+00> : vector<8x128xf32>
    %143 = tpu.matmul %137, %11, %cst_55 {dimension_numbers = #tpu.dot_dimension_numbers<[1], [0], [0], [1], [0, 0, 1, 1], [], []>} : vector<8x128xf32>, vector<128x128xf32>, vector<8x128xf32> -> vector<8x128xf32>
    %144 = arith.addf %142, %143 : vector<8x128xf32>
    %145 = arith.negf %144 : vector<8x128xf32>
    %146 = math.exp %145 : vector<8x128xf32>
    %cst_56 = arith.constant 1.000000e+00 : f32
    %147 = vector.broadcast %cst_56 : f32 to vector<8x128xf32>
    %148 = arith.addf %147, %146 : vector<8x128xf32>
    %149 = arith.divf %147, %148 : vector<8x128xf32>
    %150 = math.tanh %144 : vector<8x128xf32>
    %c96_i32_57 = arith.constant 96 : i32
    %151 = tpu.dynamic_rotate %149 by %c96_i32_57 dim 1 : vector<8x128xf32>, i32 -> vector<8x128xf32>
    %c64_i32_58 = arith.constant 64 : i32
    %152 = tpu.dynamic_rotate %150 by %c64_i32_58 dim 1 : vector<8x128xf32>, i32 -> vector<8x128xf32>
    %c32_i32_59 = arith.constant 32 : i32
    %153 = tpu.dynamic_rotate %149 by %c32_i32_59 dim 1 : vector<8x128xf32>, i32 -> vector<8x128xf32>
    %154 = arith.mulf %151, %135 : vector<8x128xf32>
    %155 = arith.mulf %149, %152 : vector<8x128xf32>
    %156 = arith.addf %154, %155 : vector<8x128xf32>
    %157 = math.tanh %156 : vector<8x128xf32>
    %158 = arith.mulf %153, %157 : vector<8x128xf32>
    %cst_60 = arith.constant dense<0.000000e+00> : vector<8x128xf32>
    %159 = tpu.matmul %158, %12, %cst_60 {dimension_numbers = #tpu.dot_dimension_numbers<[1], [0], [0], [1], [0, 0, 1, 1], [], []>} : vector<8x128xf32>, vector<128x128xf32>, vector<8x128xf32> -> vector<8x128xf32>
    %160 = vector.broadcast %13 : vector<1x128xf32> to vector<8x128xf32>
    %161 = arith.addf %159, %160 : vector<8x128xf32>
    %c48 = arith.constant 48 : index
    %c0_61 = arith.constant 0 : index
    %162 = vector.load %arg8[%c48, %c0_61] : memref<64x128xf32, #tpu.memory_space<vmem>>, vector<8x128xf32>
    tpu.vector_store %arg8[%c48, %c0_61], %161 {strides = array<i32>} : memref<64x128xf32, #tpu.memory_space<vmem>>, vector<8x128xf32>,
    %163 = vector.extract_strided_slice %10 {offsets = [56, 0], sizes = [8, 128], strides = [1, 1]} : vector<64x128xf32> to vector<8x128xf32>
    %cst_62 = arith.constant dense<0.000000e+00> : vector<8x128xf32>
    %164 = tpu.matmul %158, %11, %cst_62 {dimension_numbers = #tpu.dot_dimension_numbers<[1], [0], [0], [1], [0, 0, 1, 1], [], []>} : vector<8x128xf32>, vector<128x128xf32>, vector<8x128xf32> -> vector<8x128xf32>
    %165 = arith.addf %163, %164 : vector<8x128xf32>
    %166 = arith.negf %165 : vector<8x128xf32>
    %167 = math.exp %166 : vector<8x128xf32>
    %cst_63 = arith.constant 1.000000e+00 : f32
    %168 = vector.broadcast %cst_63 : f32 to vector<8x128xf32>
    %169 = arith.addf %168, %167 : vector<8x128xf32>
    %170 = arith.divf %168, %169 : vector<8x128xf32>
    %171 = math.tanh %165 : vector<8x128xf32>
    %c96_i32_64 = arith.constant 96 : i32
    %172 = tpu.dynamic_rotate %170 by %c96_i32_64 dim 1 : vector<8x128xf32>, i32 -> vector<8x128xf32>
    %c64_i32_65 = arith.constant 64 : i32
    %173 = tpu.dynamic_rotate %171 by %c64_i32_65 dim 1 : vector<8x128xf32>, i32 -> vector<8x128xf32>
    %c32_i32_66 = arith.constant 32 : i32
    %174 = tpu.dynamic_rotate %170 by %c32_i32_66 dim 1 : vector<8x128xf32>, i32 -> vector<8x128xf32>
    %175 = arith.mulf %172, %156 : vector<8x128xf32>
    %176 = arith.mulf %170, %173 : vector<8x128xf32>
    %177 = arith.addf %175, %176 : vector<8x128xf32>
    %178 = math.tanh %177 : vector<8x128xf32>
    %179 = arith.mulf %174, %178 : vector<8x128xf32>
    %cst_67 = arith.constant dense<0.000000e+00> : vector<8x128xf32>
    %180 = tpu.matmul %179, %12, %cst_67 {dimension_numbers = #tpu.dot_dimension_numbers<[1], [0], [0], [1], [0, 0, 1, 1], [], []>} : vector<8x128xf32>, vector<128x128xf32>, vector<8x128xf32> -> vector<8x128xf32>
    %181 = vector.broadcast %13 : vector<1x128xf32> to vector<8x128xf32>
    %182 = arith.addf %180, %181 : vector<8x128xf32>
    %c56 = arith.constant 56 : index
    %c0_68 = arith.constant 0 : index
    %183 = vector.load %arg8[%c56, %c0_68] : memref<64x128xf32, #tpu.memory_space<vmem>>, vector<8x128xf32>
    tpu.vector_store %arg8[%c56, %c0_68], %182 {strides = array<i32>} : memref<64x128xf32, #tpu.memory_space<vmem>>, vector<8x128xf32>,
    %c0_69 = arith.constant 0 : index
    %c0_70 = arith.constant 0 : index
    %184 = vector.load %arg9[%c0_69, %c0_70] : memref<8x128xf32, #tpu.memory_space<vmem>>, vector<8x128xf32>
    tpu.vector_store %arg9[%c0_69, %c0_70], %179 {strides = array<i32>} : memref<8x128xf32, #tpu.memory_space<vmem>>, vector<8x128xf32>,
    %c0_71 = arith.constant 0 : index
    %c0_72 = arith.constant 0 : index
    %185 = vector.load %arg10[%c0_71, %c0_72] : memref<8x128xf32, #tpu.memory_space<vmem>>, vector<8x128xf32>
    tpu.vector_store %arg10[%c0_71, %c0_72], %177 {strides = array<i32>} : memref<8x128xf32, #tpu.memory_space<vmem>>, vector<8x128xf32>,
    return
  }
}

</mosaic_0001>

<llo_original>
// kernel: _forward.1
$region0: #{_forward.1}
  #allocation0 [shape = 'u32[]', space=smem, size = 0x4, offset = 0x4, fixed_abs, tag = 'smem constant byte address 0x4 - core index']
  #allocation1 [shape = 'u32[144,128]{1,0:T(1,128)}', space=vmem, size = 0x12000, scoped, tag = 'internal scratch']
  %s0 = inlined_call_operand.vmem [shape: s32[64,1], index: 0, kind: input, shape index: {}]
  %s1 = inlined_call_operand.vmem [shape: f32[8,128], index: 1, kind: input, shape index: {}]
  %s2 = inlined_call_operand.vmem [shape: f32[8,128], index: 2, kind: input, shape index: {}]
  %s3 = inlined_call_operand.hbm [shape: f32[128,128], index: 3, kind: input, shape index: {}]
  %s4 = inlined_call_operand.hbm [shape: f32[128,128], index: 4, kind: input, shape index: {}]
  %s5 = inlined_call_operand.vmem [shape: f32[1,128], index: 5, kind: input, shape index: {}]
  %s6 = inlined_call_operand.vmem [shape: f32[128,128], index: 6, kind: input, shape index: {}]
  %s7 = inlined_call_operand.vmem [shape: f32[1,128], index: 7, kind: input, shape index: {}]
  %s8 = inlined_call_operand.vmem [shape: f32[64,128], index: 8, kind: output, shape index: {0}]
  %s9 = inlined_call_operand.vmem [shape: f32[8,128], index: 9, kind: output, shape index: {1}]
  %s10 = inlined_call_operand.vmem [shape: f32[8,128], index: 10, kind: output, shape index: {2}]
  %11 = xla_tuple %s8, %s9, %s10
  %s12 = sld [smem:[#allocation0]]
  $region66: #{_forward.1} parent=0
    _
  %s14 = ssub.s32 1, %s12
  %s15 = scalar_select 0, %s14, %s12
  $region1: #{_forward.1} parent=0
    #allocation2 [shape = 'u8[65536]{0}', space=vmem, size = 0x10000, scoped, tag = 'input window, operand 3, single buffered']
    #allocation3 [shape = 's32[1]{0}', space=sflag, size = 0x4, scoped, tag = 'scoped memory for _forward.1']
    #allocation4 [shape = 'u8[65536]{0}', space=vmem, size = 0x10000, scoped, tag = 'input window, operand 4, single buffered']
    #allocation5 [shape = 's32[1]{0}', space=sflag, size = 0x4, scoped, tag = 'scoped memory for _forward.1']
    %16 = vsyncpa [#allocation3], 0
    %17 = vsyncpa [#allocation5], 0
    // Predicated region
    $region2: #{_forward.1} parent=1 // pred_check
      _
    $region3: #{_forward.1} parent=1 // pred_check_branch
      %19 = sbr.rel (0) target = $region5
    $region4: #{_forward.1} parent=1 // pred_region
      _
    $region5: #{_forward.1} parent=1 // pred_fallthru
      _
    // Predicated region
    $region6: #{_forward.1} parent=1 // pred_check
      _
    $region7: #{_forward.1} parent=1 // pred_check_branch
      %21 = sbr.rel (0) target = $region9
    $region8: #{_forward.1} parent=1 // pred_region
      _
    $region9: #{_forward.1} parent=1 // pred_fallthru
      _
    // Predicated region
    $region10: #{_forward.1} parent=1 // pred_check
      _
    $region11: #{_forward.1} parent=1 // pred_check_branch
      %23 = sbr.rel (0) target = $region13
    $region12: #{_forward.1} parent=1 // pred_region
      _
    $region13: #{_forward.1} parent=1 // pred_fallthru
      _
    // Predicated region
    $region14: #{_forward.1} parent=1 // pred_check
      _
    $region15: #{_forward.1} parent=1 // pred_check_branch
      %25 = sbr.rel (0) target = $region17
    $region16: #{_forward.1} parent=1 // pred_region
      %s27 = ssub.s32 2048, 2048
      %28 = vsyncadd [#allocation3], %s27
      %s29 = sshll.u32 [#allocation2], 4
      %s30 = int_to_ptr.vmem [resolvable:$true] %s29
      %35 = dma.hbm_to_vmem [thread:$0]  %s3, 2048, %s30, [#allocation3], 128, 128, 8
    $region17: #{_forward.1} parent=1 // pred_fallthru
      _
    // Predicated region
    $region18: #{_forward.1} parent=1 // pred_check
      _
    $region19: #{_forward.1} parent=1 // pred_check_branch
      %37 = sbr.rel (0) target = $region21
    $region20: #{_forward.1} parent=1 // pred_region
      %s39 = ssub.s32 2048, 2048
      %40 = vsyncadd [#allocation5], %s39
      %s41 = sshll.u32 [#allocation4], 4
      %s42 = int_to_ptr.vmem [resolvable:$true] %s41
      %47 = dma.hbm_to_vmem [thread:$0]  %s4, 2048, %s42, [#allocation5], 128, 128, 8
    $region21: #{_forward.1} parent=1 // pred_fallthru
      _
    // Predicated region
    $region22: #{_forward.1} parent=1 // pred_check
      _
    $region23: #{_forward.1} parent=1 // pred_check_branch
      %49 = sbr.rel (0) target = $region25
    $region24: #{_forward.1} parent=1 // pred_region
      _
    $region25: #{_forward.1} parent=1 // pred_fallthru
      _
    // Predicated region
    $region26: #{_forward.1} parent=1 // pred_check
      _
    $region27: #{_forward.1} parent=1 // pred_check_branch
      %51 = sbr.rel (0) target = $region29
    $region28: #{_forward.1} parent=1 // pred_region
      _
    $region29: #{_forward.1} parent=1 // pred_fallthru
      _
    // Predicated region
    $region30: #{_forward.1} parent=1 // pred_check
      _
    $region31: #{_forward.1} parent=1 // pred_check_branch
      %53 = sbr.rel (0) target = $region33
    $region32: #{_forward.1} parent=1 // pred_region
      _
    $region33: #{_forward.1} parent=1 // pred_fallthru
      _
    // Predicated region
    $region34: #{_forward.1} parent=1 // pred_check
      _
    $region35: #{_forward.1} parent=1 // pred_check_branch
      %55 = sbr.rel (0) target = $region37
    $region36: #{_forward.1} parent=1 // pred_region
      %56 = dma.done [#allocation3], 2048
    $region37: #{_forward.1} parent=1 // pred_fallthru
      _
    // Predicated region
    $region38: #{_forward.1} parent=1 // pred_check
      _
    $region39: #{_forward.1} parent=1 // pred_check_branch
      %58 = sbr.rel (0) target = $region41
    $region40: #{_forward.1} parent=1 // pred_region
      %59 = dma.done [#allocation5], 2048
    $region41: #{_forward.1} parent=1 // pred_fallthru
      _
    %v60 = vld [vmem:[%s0] sm:$0xff]
    %v61 = vld [vmem:[%s0 + $0x8] sm:$0xff]
    %v62 = vld [vmem:[%s0 + $0x10] sm:$0xff]
    %v63 = vld [vmem:[%s0 + $0x18] sm:$0xff]
    %v64 = vld [vmem:[%s0 + $0x20] sm:$0xff]
    %v65 = vld [vmem:[%s0 + $0x28] sm:$0xff]
    %v66 = vld [vmem:[%s0 + $0x30] sm:$0xff]
    %v67 = vld [vmem:[%s0 + $0x38] sm:$0xff]
    %v68 = vlaneseq
    %v69 = vand.u32 %v68, 127
    %70 = vset.pattern.permute.xlu0 0
    %71 = vperm.xlu0 %70, %v60
    %v72 = vpop.permute.xlu0 %71
    %73 = vset.pattern.permute.xlu0 0
    %74 = vperm.xlu0 %73, %v61
    %v75 = vpop.permute.xlu0 %74
    %76 = vset.pattern.permute.xlu0 0
    %77 = vperm.xlu0 %76, %v62
    %v78 = vpop.permute.xlu0 %77
    %79 = vset.pattern.permute.xlu0 0
    %80 = vperm.xlu0 %79, %v63
    %v81 = vpop.permute.xlu0 %80
    %82 = vset.pattern.permute.xlu0 0
    %83 = vperm.xlu0 %82, %v64
    %v84 = vpop.permute.xlu0 %83
    %85 = vset.pattern.permute.xlu0 0
    %86 = vperm.xlu0 %85, %v65
    %v87 = vpop.permute.xlu0 %86
    %88 = vset.pattern.permute.xlu0 0
    %89 = vperm.xlu0 %88, %v66
    %v90 = vpop.permute.xlu0 %89
    %91 = vset.pattern.permute.xlu0 0
    %92 = vperm.xlu0 %91, %v67
    %v93 = vpop.permute.xlu0 %92
    %vm94 = vcmp.eq.s32.totalorder %v69, %v72
    %vm95 = vcmp.eq.s32.totalorder %v69, %v75
    %vm96 = vcmp.eq.s32.totalorder %v69, %v78
    %vm97 = vcmp.eq.s32.totalorder %v69, %v81
    %vm98 = vcmp.eq.s32.totalorder %v69, %v84
    %vm99 = vcmp.eq.s32.totalorder %v69, %v87
    %vm100 = vcmp.eq.s32.totalorder %v69, %v90
    %vm101 = vcmp.eq.s32.totalorder %v69, %v93
    %v102 = vsel %vm94, 1, 0
    %v103 = vsel %vm95, 1, 0
    %v104 = vsel %vm96, 1, 0
    %v105 = vsel %vm97, 1, 0
    %v106 = vsel %vm98, 1, 0
    %v107 = vsel %vm99, 1, 0
    %v108 = vsel %vm100, 1, 0
    %v109 = vsel %vm101, 1, 0
    %v110 = vcvt.s32.f32 %v102
    %v111 = vcvt.s32.f32 %v103
    %v112 = vcvt.s32.f32 %v104
    %v113 = vcvt.s32.f32 %v105
    %v114 = vcvt.s32.f32 %v106
    %v115 = vcvt.s32.f32 %v107
    %v116 = vcvt.s32.f32 %v108
    %v117 = vcvt.s32.f32 %v109
    %v118 = vld [vmem:[#allocation2] sm:$0xff]
    %v119 = vld [vmem:[#allocation2 + $0x8] sm:$0xff]
    %v120 = vld [vmem:[#allocation2 + $0x10] sm:$0xff]
    %v121 = vld [vmem:[#allocation2 + $0x18] sm:$0xff]
    %v122 = vld [vmem:[#allocation2 + $0x20] sm:$0xff]
    %v123 = vld [vmem:[#allocation2 + $0x28] sm:$0xff]
    %v124 = vld [vmem:[#allocation2 + $0x30] sm:$0xff]
    %v125 = vld [vmem:[#allocation2 + $0x38] sm:$0xff]
    %v126 = vld [vmem:[#allocation2 + $0x40] sm:$0xff]
    %v127 = vld [vmem:[#allocation2 + $0x48] sm:$0xff]
    %v128 = vld [vmem:[#allocation2 + $0x50] sm:$0xff]
    %v129 = vld [vmem:[#allocation2 + $0x58] sm:$0xff]
    %v130 = vld [vmem:[#allocation2 + $0x60] sm:$0xff]
    %v131 = vld [vmem:[#allocation2 + $0x68] sm:$0xff]
    %v132 = vld [vmem:[#allocation2 + $0x70] sm:$0xff]
    %v133 = vld [vmem:[#allocation2 + $0x78] sm:$0xff]
    %v134 = vld [vmem:[%s5] sm:$0x1]
    %v136 = vlaneseq
    %v137 = vshrl.u32 %v136, 7
    %v138 = vsub.s32 0, %v137
    %v139 = vrot.slane %v134, %v138
    %141 = vmatprep.subr.mxu0 0.0
    %142 = vmatpush1.msra.mxu0 %v118
    %143 = vmatprep.subr.mxu0 0.0
    %144 = vmatpush1.msra.mxu0 %v119
    %145 = vmatprep.subr.mxu0 0.0
    %146 = vmatpush1.msra.mxu0 %v120
    %147 = vmatprep.subr.mxu0 0.0
    %148 = vmatpush1.msra.mxu0 %v121
    %149 = vmatprep.subr.mxu0 0.0
    %150 = vmatpush1.msra.mxu0 %v122
    %151 = vmatprep.subr.mxu0 0.0
    %152 = vmatpush1.msra.mxu0 %v123
    %153 = vmatprep.subr.mxu0 0.0
    %154 = vmatpush1.msra.mxu0 %v124
    %155 = vmatprep.subr.mxu0 0.0
    %156 = vmatpush1.msra.mxu0 %v125
    %157 = vmatprep.subr.mxu0 0.0
    %158 = vmatpush1.msra.mxu0 %v126
    %159 = vmatprep.subr.mxu0 0.0
    %160 = vmatpush1.msra.mxu0 %v127
    %161 = vmatprep.subr.mxu0 0.0
    %162 = vmatpush1.msra.mxu0 %v128
    %163 = vmatprep.subr.mxu0 0.0
    %164 = vmatpush1.msra.mxu0 %v129
    %165 = vmatprep.subr.mxu0 0.0
    %166 = vmatpush1.msra.mxu0 %v130
    %167 = vmatprep.subr.mxu0 0.0
    %168 = vmatpush1.msra.mxu0 %v131
    %169 = vmatprep.subr.mxu0 0.0
    %170 = vmatpush1.msra.mxu0 %v132
    %171 = vmatprep.subr.mxu0 0.0
    %172 = vmatpush1.msra.mxu0 %v133
    %173 = vmatprep.subr.mxu0 0.0
    %174 = vmatpush1.msra.mxu0 0.0
    %175 = vmatprep.subr.mxu0 0.0
    %176 = vmatpush1.msra.mxu0 0.0
    %177 = vmatprep.subr.mxu0 0.0
    %178 = vmatpush1.msra.mxu0 0.0
    %179 = vmatprep.subr.mxu0 0.0
    %180 = vmatpush1.msra.mxu0 0.0
    %181 = vmatprep.subr.mxu0 0.0
    %182 = vmatpush1.msra.mxu0 0.0
    %183 = vmatprep.subr.mxu0 0.0
    %184 = vmatpush1.msra.mxu0 0.0
    %185 = vmatprep.subr.mxu0 0.0
    %186 = vmatpush1.msra.mxu0 0.0
    %187 = vmatprep.subr.mxu0 0.0
    %188 = vmatpush1.msra.mxu0 0.0
    %189 = vmatprep.subr.mxu0 0.0
    %190 = vmatpush1.msra.mxu0 0.0
    %191 = vmatprep.subr.mxu0 0.0
    %192 = vmatpush1.msra.mxu0 0.0
    %193 = vmatprep.subr.mxu0 0.0
    %194 = vmatpush1.msra.mxu0 0.0
    %195 = vmatprep.subr.mxu0 0.0
    %196 = vmatpush1.msra.mxu0 0.0
    %197 = vmatprep.subr.mxu0 0.0
    %198 = vmatpush1.msra.mxu0 0.0
    %199 = vmatprep.subr.mxu0 0.0
    %200 = vmatpush1.msra.mxu0 0.0
    %201 = vmatprep.subr.mxu0 0.0
    %202 = vmatpush1.msra.mxu0 0.0
    %203 = vmatprep.subr.mxu0 0.0
    %204 = vmatpush1.msra.mxu0 0.0
    %205 = vmatprep.mubr.f32.mxu0 0.0
    %206 = vmatmul.mubr.f32.gmra.mrb[0].mxu0 %v110
    %v207 = vpop.f32.mrb[0].mxu0
    %v208 = vadd.f32 %v139, %v207
    %v209 = vpop.f32.mrb[0].mxu0
    %210 = vmatprep.mubr.f32.mxu0 0.0
    %211 = vmatmul.mubr.f32.gmra.mrb[0].mxu0 %v111
    %v212 = vpop.f32.mrb[0].mxu0
    %v213 = vadd.f32 %v139, %v212
    %v214 = vpop.f32.mrb[0].mxu0
    %215 = vmatprep.mubr.f32.mxu0 0.0
    %216 = vmatmul.mubr.f32.gmra.mrb[0].mxu0 %v112
    %v217 = vpop.f32.mrb[0].mxu0
    %v218 = vadd.f32 %v139, %v217
    %v219 = vpop.f32.mrb[0].mxu0
    %220 = vmatprep.mubr.f32.mxu0 0.0
    %221 = vmatmul.mubr.f32.gmra.mrb[0].mxu0 %v113
    %v222 = vpop.f32.mrb[0].mxu0
    %v223 = vadd.f32 %v139, %v222
    %v224 = vpop.f32.mrb[0].mxu0
    %225 = vmatprep.mubr.f32.mxu0 0.0
    %226 = vmatmul.mubr.f32.gmra.mrb[0].mxu0 %v114
    %v227 = vpop.f32.mrb[0].mxu0
    %v228 = vadd.f32 %v139, %v227
    %v229 = vpop.f32.mrb[0].mxu0
    %230 = vmatprep.mubr.f32.mxu0 0.0
    %231 = vmatmul.mubr.f32.gmra.mrb[0].mxu0 %v115
    %v232 = vpop.f32.mrb[0].mxu0
    %v233 = vadd.f32 %v139, %v232
    %v234 = vpop.f32.mrb[0].mxu0
    %235 = vmatprep.mubr.f32.mxu0 0.0
    %236 = vmatmul.mubr.f32.gmra.mrb[0].mxu0 %v116
    %v237 = vpop.f32.mrb[0].mxu0
    %v238 = vadd.f32 %v139, %v237
    %v239 = vpop.f32.mrb[0].mxu0
    %240 = vmatprep.mubr.f32.mxu0 0.0
    %241 = vmatmul.mubr.f32.gmra.mrb[0].mxu0 %v117
    %v242 = vpop.f32.mrb[0].mxu0
    %v243 = vadd.f32 %v139, %v242
    %v244 = vpop.f32.mrb[0].mxu0
    %245 = vdwg.mxu0
    %v246 = vld [vmem:[#allocation4] sm:$0xff]
    %v247 = vld [vmem:[#allocation4 + $0x8] sm:$0xff]
    %v248 = vld [vmem:[#allocation4 + $0x10] sm:$0xff]
    %v249 = vld [vmem:[#allocation4 + $0x18] sm:$0xff]
    %v250 = vld [vmem:[#allocation4 + $0x20] sm:$0xff]
    %v251 = vld [vmem:[#allocation4 + $0x28] sm:$0xff]
    %v252 = vld [vmem:[#allocation4 + $0x30] sm:$0xff]
    %v253 = vld [vmem:[#allocation4 + $0x38] sm:$0xff]
    %v254 = vld [vmem:[#allocation4 + $0x40] sm:$0xff]
    %v255 = vld [vmem:[#allocation4 + $0x48] sm:$0xff]
    %v256 = vld [vmem:[#allocation4 + $0x50] sm:$0xff]
    %v257 = vld [vmem:[#allocation4 + $0x58] sm:$0xff]
    %v258 = vld [vmem:[#allocation4 + $0x60] sm:$0xff]
    %v259 = vld [vmem:[#allocation4 + $0x68] sm:$0xff]
    %v260 = vld [vmem:[#allocation4 + $0x70] sm:$0xff]
    %v261 = vld [vmem:[#allocation4 + $0x78] sm:$0xff]
    %v262 = vld [vmem:[%s6] sm:$0xff]
    %v263 = vld [vmem:[%s6 + $0x8] sm:$0xff]
    %v264 = vld [vmem:[%s6 + $0x10] sm:$0xff]
    %v265 = vld [vmem:[%s6 + $0x18] sm:$0xff]
    %v266 = vld [vmem:[%s6 + $0x20] sm:$0xff]
    %v267 = vld [vmem:[%s6 + $0x28] sm:$0xff]
    %v268 = vld [vmem:[%s6 + $0x30] sm:$0xff]
    %v269 = vld [vmem:[%s6 + $0x38] sm:$0xff]
    %v270 = vld [vmem:[%s6 + $0x40] sm:$0xff]
    %v271 = vld [vmem:[%s6 + $0x48] sm:$0xff]
    %v272 = vld [vmem:[%s6 + $0x50] sm:$0xff]
    %v273 = vld [vmem:[%s6 + $0x58] sm:$0xff]
    %v274 = vld [vmem:[%s6 + $0x60] sm:$0xff]
    %v275 = vld [vmem:[%s6 + $0x68] sm:$0xff]
    %v276 = vld [vmem:[%s6 + $0x70] sm:$0xff]
    %v277 = vld [vmem:[%s6 + $0x78] sm:$0xff]
    %v278 = vld [vmem:[%s7] sm:$0x1]
    %v279 = vld [vmem:[%s1] sm:$0xff]
    %v280 = vld [vmem:[%s2] sm:$0xff]
    %281 = vmatprep.subr.mxu0 0.0
    %282 = vmatpush1.msra.mxu0 %v246
    %283 = vmatprep.subr.mxu0 0.0
    %284 = vmatpush1.msra.mxu0 %v247
    %285 = vmatprep.subr.mxu0 0.0
    %286 = vmatpush1.msra.mxu0 %v248
    %287 = vmatprep.subr.mxu0 0.0
    %288 = vmatpush1.msra.mxu0 %v249
    %289 = vmatprep.subr.mxu0 0.0
    %290 = vmatpush1.msra.mxu0 %v250
    %291 = vmatprep.subr.mxu0 0.0
    %292 = vmatpush1.msra.mxu0 %v251
    %293 = vmatprep.subr.mxu0 0.0
    %294 = vmatpush1.msra.mxu0 %v252
    %295 = vmatprep.subr.mxu0 0.0
    %296 = vmatpush1.msra.mxu0 %v253
    %297 = vmatprep.subr.mxu0 0.0
    %298 = vmatpush1.msra.mxu0 %v254
    %299 = vmatprep.subr.mxu0 0.0
    %300 = vmatpush1.msra.mxu0 %v255
    %301 = vmatprep.subr.mxu0 0.0
    %302 = vmatpush1.msra.mxu0 %v256
    %303 = vmatprep.subr.mxu0 0.0
    %304 = vmatpush1.msra.mxu0 %v257
    %305 = vmatprep.subr.mxu0 0.0
    %306 = vmatpush1.msra.mxu0 %v258
    %307 = vmatprep.subr.mxu0 0.0
    %308 = vmatpush1.msra.mxu0 %v259
    %309 = vmatprep.subr.mxu0 0.0
    %310 = vmatpush1.msra.mxu0 %v260
    %311 = vmatprep.subr.mxu0 0.0
    %312 = vmatpush1.msra.mxu0 %v261
    %313 = vmatprep.subr.mxu0 0.0
    %314 = vmatpush1.msra.mxu0 0.0
    %315 = vmatprep.subr.mxu0 0.0
    %316 = vmatpush1.msra.mxu0 0.0
    %317 = vmatprep.subr.mxu0 0.0
    %318 = vmatpush1.msra.mxu0 0.0
    %319 = vmatprep.subr.mxu0 0.0
    %320 = vmatpush1.msra.mxu0 0.0
    %321 = vmatprep.subr.mxu0 0.0
    %322 = vmatpush1.msra.mxu0 0.0
    %323 = vmatprep.subr.mxu0 0.0
    %324 = vmatpush1.msra.mxu0 0.0
    %325 = vmatprep.subr.mxu0 0.0
    %326 = vmatpush1.msra.mxu0 0.0
    %327 = vmatprep.subr.mxu0 0.0
    %328 = vmatpush1.msra.mxu0 0.0
    %329 = vmatprep.subr.mxu0 0.0
    %330 = vmatpush1.msra.mxu0 0.0
    %331 = vmatprep.subr.mxu0 0.0
    %332 = vmatpush1.msra.mxu0 0.0
    %333 = vmatprep.subr.mxu0 0.0
    %334 = vmatpush1.msra.mxu0 0.0
    %335 = vmatprep.subr.mxu0 0.0
    %336 = vmatpush1.msra.mxu0 0.0
    %337 = vmatprep.subr.mxu0 0.0
    %338 = vmatpush1.msra.mxu0 0.0
    %339 = vmatprep.subr.mxu0 0.0
    %340 = vmatpush1.msra.mxu0 0.0
    %341 = vmatprep.subr.mxu0 0.0
    %342 = vmatpush1.msra.mxu0 0.0
    %343 = vmatprep.subr.mxu0 0.0
    %344 = vmatpush1.msra.mxu0 0.0
    %345 = vmatprep.mubr.f32.mxu0 0.0
    %346 = vmatmul.mubr.f32.gmra.mrb[0].mxu0 %v279
    %v347 = vpop.f32.mrb[0].mxu0
    %v348 = vadd.f32 0.0, %v347
    %v349 = vpop.f32.mrb[0].mxu0
    %350 = vdwg.mxu0
    %v351 = vadd.f32 %v208, %v348
    %v352 = vxor.u32 %v351, 2147483648
    %v353 = vmul.f32 %v352, 1.442695
    %v354 = vpow.pop %v353
    %v355 = vadd.f32 %v354, 1.0
    %v356 = vrcp.pop %v355
    %v357 = vmul.f32 1.0, %v356
    %v358 = vtanh.pop %v351
    %359 = vrot.lane.b32.xlu0 %v357, 96
    %v360 = vpop.permute.xlu0 %359
    %361 = vrot.lane.b32.xlu0 %v358, 64
    %v362 = vpop.permute.xlu0 %361
    %363 = vrot.lane.b32.xlu0 %v357, 32
    %v364 = vpop.permute.xlu0 %363
    %v365 = vmul.f32 %v360, %v280
    %v366 = vmul.f32 %v357, %v362
    %v367 = vadd.f32 %v365, %v366
    %v368 = vtanh.pop %v367
    %v369 = vmul.f32 %v364, %v368
    %v371 = vlaneseq
    %v372 = vshrl.u32 %v371, 7
    %v373 = vsub.s32 0, %v372
    %v374 = vrot.slane %v278, %v373
    %376 = vmatprep.subr.mxu0 0.0
    %377 = vmatpush1.msra.mxu0 %v262
    %378 = vmatprep.subr.mxu0 0.0
    %379 = vmatpush1.msra.mxu0 %v263
    %380 = vmatprep.subr.mxu0 0.0
    %381 = vmatpush1.msra.mxu0 %v264
    %382 = vmatprep.subr.mxu0 0.0
    %383 = vmatpush1.msra.mxu0 %v265
    %384 = vmatprep.subr.mxu0 0.0
    %385 = vmatpush1.msra.mxu0 %v266
    %386 = vmatprep.subr.mxu0 0.0
    %387 = vmatpush1.msra.mxu0 %v267
    %388 = vmatprep.subr.mxu0 0.0
    %389 = vmatpush1.msra.mxu0 %v268
    %390 = vmatprep.subr.mxu0 0.0
    %391 = vmatpush1.msra.mxu0 %v269
    %392 = vmatprep.subr.mxu0 0.0
    %393 = vmatpush1.msra.mxu0 %v270
    %394 = vmatprep.subr.mxu0 0.0
    %395 = vmatpush1.msra.mxu0 %v271
    %396 = vmatprep.subr.mxu0 0.0
    %397 = vmatpush1.msra.mxu0 %v272
    %398 = vmatprep.subr.mxu0 0.0
    %399 = vmatpush1.msra.mxu0 %v273
    %400 = vmatprep.subr.mxu0 0.0
    %401 = vmatpush1.msra.mxu0 %v274
    %402 = vmatprep.subr.mxu0 0.0
    %403 = vmatpush1.msra.mxu0 %v275
    %404 = vmatprep.subr.mxu0 0.0
    %405 = vmatpush1.msra.mxu0 %v276
    %406 = vmatprep.subr.mxu0 0.0
    %407 = vmatpush1.msra.mxu0 %v277
    %408 = vmatprep.subr.mxu0 0.0
    %409 = vmatpush1.msra.mxu0 0.0
    %410 = vmatprep.subr.mxu0 0.0
    %411 = vmatpush1.msra.mxu0 0.0
    %412 = vmatprep.subr.mxu0 0.0
    %413 = vmatpush1.msra.mxu0 0.0
    %414 = vmatprep.subr.mxu0 0.0
    %415 = vmatpush1.msra.mxu0 0.0
    %416 = vmatprep.subr.mxu0 0.0
    %417 = vmatpush1.msra.mxu0 0.0
    %418 = vmatprep.subr.mxu0 0.0
    %419 = vmatpush1.msra.mxu0 0.0
    %420 = vmatprep.subr.mxu0 0.0
    %421 = vmatpush1.msra.mxu0 0.0
    %422 = vmatprep.subr.mxu0 0.0
    %423 = vmatpush1.msra.mxu0 0.0
    %424 = vmatprep.subr.mxu0 0.0
    %425 = vmatpush1.msra.mxu0 0.0
    %426 = vmatprep.subr.mxu0 0.0
    %427 = vmatpush1.msra.mxu0 0.0
    %428 = vmatprep.subr.mxu0 0.0
    %429 = vmatpush1.msra.mxu0 0.0
    %430 = vmatprep.subr.mxu0 0.0
    %431 = vmatpush1.msra.mxu0 0.0
    %432 = vmatprep.subr.mxu0 0.0
    %433 = vmatpush1.msra.mxu0 0.0
    %434 = vmatprep.subr.mxu0 0.0
    %435 = vmatpush1.msra.mxu0 0.0
    %436 = vmatprep.subr.mxu0 0.0
    %437 = vmatpush1.msra.mxu0 0.0
    %438 = vmatprep.subr.mxu0 0.0
    %439 = vmatpush1.msra.mxu0 0.0
    %440 = vmatprep.mubr.f32.mxu0 0.0
    %441 = vmatmul.mubr.f32.gmra.mrb[0].mxu0 %v369
    %v442 = vpop.f32.mrb[0].mxu0
    %v443 = vadd.f32 %v374, %v442
    %v444 = vpop.f32.mrb[0].mxu0
    %445 = vdwg.mxu0
    %446 = vst [vmem:[%s8] sm:$0xff] %v443
    %447 = vmatprep.subr.mxu0 0.0
    %448 = vmatpush1.msra.mxu0 %v246
    %449 = vmatprep.subr.mxu0 0.0
    %450 = vmatpush1.msra.mxu0 %v247
    %451 = vmatprep.subr.mxu0 0.0
    %452 = vmatpush1.msra.mxu0 %v248
    %453 = vmatprep.subr.mxu0 0.0
    %454 = vmatpush1.msra.mxu0 %v249
    %455 = vmatprep.subr.mxu0 0.0
    %456 = vmatpush1.msra.mxu0 %v250
    %457 = vmatprep.subr.mxu0 0.0
    %458 = vmatpush1.msra.mxu0 %v251
    %459 = vmatprep.subr.mxu0 0.0
    %460 = vmatpush1.msra.mxu0 %v252
    %461 = vmatprep.subr.mxu0 0.0
    %462 = vmatpush1.msra.mxu0 %v253
    %463 = vmatprep.subr.mxu0 0.0
    %464 = vmatpush1.msra.mxu0 %v254
    %465 = vmatprep.subr.mxu0 0.0
    %466 = vmatpush1.msra.mxu0 %v255
    %467 = vmatprep.subr.mxu0 0.0
    %468 = vmatpush1.msra.mxu0 %v256
    %469 = vmatprep.subr.mxu0 0.0
    %470 = vmatpush1.msra.mxu0 %v257
    %471 = vmatprep.subr.mxu0 0.0
    %472 = vmatpush1.msra.mxu0 %v258
    %473 = vmatprep.subr.mxu0 0.0
    %474 = vmatpush1.msra.mxu0 %v259
    %475 = vmatprep.subr.mxu0 0.0
    %476 = vmatpush1.msra.mxu0 %v260
    %477 = vmatprep.subr.mxu0 0.0
    %478 = vmatpush1.msra.mxu0 %v261
    %479 = vmatprep.subr.mxu0 0.0
    %480 = vmatpush1.msra.mxu0 0.0
    %481 = vmatprep.subr.mxu0 0.0
    %482 = vmatpush1.msra.mxu0 0.0
    %483 = vmatprep.subr.mxu0 0.0
    %484 = vmatpush1.msra.mxu0 0.0
    %485 = vmatprep.subr.mxu0 0.0
    %486 = vmatpush1.msra.mxu0 0.0
    %487 = vmatprep.subr.mxu0 0.0
    %488 = vmatpush1.msra.mxu0 0.0
    %489 = vmatprep.subr.mxu0 0.0
    %490 = vmatpush1.msra.mxu0 0.0
    %491 = vmatprep.subr.mxu0 0.0
    %492 = vmatpush1.msra.mxu0 0.0
    %493 = vmatprep.subr.mxu0 0.0
    %494 = vmatpush1.msra.mxu0 0.0
    %495 = vmatprep.subr.mxu0 0.0
    %496 = vmatpush1.msra.mxu0 0.0
    %497 = vmatprep.subr.mxu0 0.0
    %498 = vmatpush1.msra.mxu0 0.0
    %499 = vmatprep.subr.mxu0 0.0
    %500 = vmatpush1.msra.mxu0 0.0
    %501 = vmatprep.subr.mxu0 0.0
    %502 = vmatpush1.msra.mxu0 0.0
    %503 = vmatprep.subr.mxu0 0.0
    %504 = vmatpush1.msra.mxu0 0.0
    %505 = vmatprep.subr.mxu0 0.0
    %506 = vmatpush1.msra.mxu0 0.0
    %507 = vmatprep.subr.mxu0 0.0
    %508 = vmatpush1.msra.mxu0 0.0
    %509 = vmatprep.subr.mxu0 0.0
    %510 = vmatpush1.msra.mxu0 0.0
    %511 = vmatprep.mubr.f32.mxu0 0.0
    %512 = vmatmul.mubr.f32.gmra.mrb[0].mxu0 %v369
    %v513 = vpop.f32.mrb[0].mxu0
    %v514 = vadd.f32 0.0, %v513
    %v515 = vpop.f32.mrb[0].mxu0
    %516 = vdwg.mxu0
    %v517 = vadd.f32 %v213, %v514
    %v518 = vxor.u32 %v517, 2147483648
    %v519 = vmul.f32 %v518, 1.442695
    %v520 = vpow.pop %v519
    %v521 = vadd.f32 %v520, 1.0
    %v522 = vrcp.pop %v521
    %v523 = vmul.f32 1.0, %v522
    %v524 = vtanh.pop %v517
    %525 = vrot.lane.b32.xlu0 %v523, 96
    %v526 = vpop.permute.xlu0 %525
    %527 = vrot.lane.b32.xlu0 %v524, 64
    %v528 = vpop.permute.xlu0 %527
    %529 = vrot.lane.b32.xlu0 %v523, 32
    %v530 = vpop.permute.xlu0 %529
    %v531 = vmul.f32 %v526, %v367
    %v532 = vmul.f32 %v523, %v528
    %v533 = vadd.f32 %v531, %v532
    %v534 = vtanh.pop %v533
    %v535 = vmul.f32 %v530, %v534
    %536 = vmatprep.subr.mxu0 0.0
    %537 = vmatpush1.msra.mxu0 %v262
    %538 = vmatprep.subr.mxu0 0.0
    %539 = vmatpush1.msra.mxu0 %v263
    %540 = vmatprep.subr.mxu0 0.0
    %541 = vmatpush1.msra.mxu0 %v264
    %542 = vmatprep.subr.mxu0 0.0
    %543 = vmatpush1.msra.mxu0 %v265
    %544 = vmatprep.subr.mxu0 0.0
    %545 = vmatpush1.msra.mxu0 %v266
    %546 = vmatprep.subr.mxu0 0.0
    %547 = vmatpush1.msra.mxu0 %v267
    %548 = vmatprep.subr.mxu0 0.0
    %549 = vmatpush1.msra.mxu0 %v268
    %550 = vmatprep.subr.mxu0 0.0
    %551 = vmatpush1.msra.mxu0 %v269
    %552 = vmatprep.subr.mxu0 0.0
    %553 = vmatpush1.msra.mxu0 %v270
    %554 = vmatprep.subr.mxu0 0.0
    %555 = vmatpush1.msra.mxu0 %v271
    %556 = vmatprep.subr.mxu0 0.0
    %557 = vmatpush1.msra.mxu0 %v272
    %558 = vmatprep.subr.mxu0 0.0
    %559 = vmatpush1.msra.mxu0 %v273
    %560 = vmatprep.subr.mxu0 0.0
    %561 = vmatpush1.msra.mxu0 %v274
    %562 = vmatprep.subr.mxu0 0.0
    %563 = vmatpush1.msra.mxu0 %v275
    %564 = vmatprep.subr.mxu0 0.0
    %565 = vmatpush1.msra.mxu0 %v276
    %566 = vmatprep.subr.mxu0 0.0
    %567 = vmatpush1.msra.mxu0 %v277
    %568 = vmatprep.subr.mxu0 0.0
    %569 = vmatpush1.msra.mxu0 0.0
    %570 = vmatprep.subr.mxu0 0.0
    %571 = vmatpush1.msra.mxu0 0.0
    %572 = vmatprep.subr.mxu0 0.0
    %573 = vmatpush1.msra.mxu0 0.0
    %574 = vmatprep.subr.mxu0 0.0
    %575 = vmatpush1.msra.mxu0 0.0
    %576 = vmatprep.subr.mxu0 0.0
    %577 = vmatpush1.msra.mxu0 0.0
    %578 = vmatprep.subr.mxu0 0.0
    %579 = vmatpush1.msra.mxu0 0.0
    %580 = vmatprep.subr.mxu0 0.0
    %581 = vmatpush1.msra.mxu0 0.0
    %582 = vmatprep.subr.mxu0 0.0
    %583 = vmatpush1.msra.mxu0 0.0
    %584 = vmatprep.subr.mxu0 0.0
    %585 = vmatpush1.msra.mxu0 0.0
    %586 = vmatprep.subr.mxu0 0.0
    %587 = vmatpush1.msra.mxu0 0.0
    %588 = vmatprep.subr.mxu0 0.0
    %589 = vmatpush1.msra.mxu0 0.0
    %590 = vmatprep.subr.mxu0 0.0
    %591 = vmatpush1.msra.mxu0 0.0
    %592 = vmatprep.subr.mxu0 0.0
    %593 = vmatpush1.msra.mxu0 0.0
    %594 = vmatprep.subr.mxu0 0.0
    %595 = vmatpush1.msra.mxu0 0.0
    %596 = vmatprep.subr.mxu0 0.0
    %597 = vmatpush1.msra.mxu0 0.0
    %598 = vmatprep.subr.mxu0 0.0
    %599 = vmatpush1.msra.mxu0 0.0
    %600 = vmatprep.mubr.f32.mxu0 0.0
    %601 = vmatmul.mubr.f32.gmra.mrb[0].mxu0 %v535
    %v602 = vpop.f32.mrb[0].mxu0
    %v603 = vadd.f32 %v374, %v602
    %v604 = vpop.f32.mrb[0].mxu0
    %605 = vdwg.mxu0
    %606 = vst [vmem:[%s8 + $0x8] sm:$0xff] %v603
    %607 = vmatprep.subr.mxu0 0.0
    %608 = vmatpush1.msra.mxu0 %v246
    %609 = vmatprep.subr.mxu0 0.0
    %610 = vmatpush1.msra.mxu0 %v247
    %611 = vmatprep.subr.mxu0 0.0
    %612 = vmatpush1.msra.mxu0 %v248
    %613 = vmatprep.subr.mxu0 0.0
    %614 = vmatpush1.msra.mxu0 %v249
    %615 = vmatprep.subr.mxu0 0.0
    %616 = vmatpush1.msra.mxu0 %v250
    %617 = vmatprep.subr.mxu0 0.0
    %618 = vmatpush1.msra.mxu0 %v251
    %619 = vmatprep.subr.mxu0 0.0
    %620 = vmatpush1.msra.mxu0 %v252
    %621 = vmatprep.subr.mxu0 0.0
    %622 = vmatpush1.msra.mxu0 %v253
    %623 = vmatprep.subr.mxu0 0.0
    %624 = vmatpush1.msra.mxu0 %v254
    %625 = vmatprep.subr.mxu0 0.0
    %626 = vmatpush1.msra.mxu0 %v255
    %627 = vmatprep.subr.mxu0 0.0
    %628 = vmatpush1.msra.mxu0 %v256
    %629 = vmatprep.subr.mxu0 0.0
    %630 = vmatpush1.msra.mxu0 %v257
    %631 = vmatprep.subr.mxu0 0.0
    %632 = vmatpush1.msra.mxu0 %v258
    %633 = vmatprep.subr.mxu0 0.0
    %634 = vmatpush1.msra.mxu0 %v259
    %635 = vmatprep.subr.mxu0 0.0
    %636 = vmatpush1.msra.mxu0 %v260
    %637 = vmatprep.subr.mxu0 0.0
    %638 = vmatpush1.msra.mxu0 %v261
    %639 = vmatprep.subr.mxu0 0.0
    %640 = vmatpush1.msra.mxu0 0.0
    %641 = vmatprep.subr.mxu0 0.0
    %642 = vmatpush1.msra.mxu0 0.0
    %643 = vmatprep.subr.mxu0 0.0
    %644 = vmatpush1.msra.mxu0 0.0
    %645 = vmatprep.subr.mxu0 0.0
    %646 = vmatpush1.msra.mxu0 0.0
    %647 = vmatprep.subr.mxu0 0.0
    %648 = vmatpush1.msra.mxu0 0.0
    %649 = vmatprep.subr.mxu0 0.0
    %650 = vmatpush1.msra.mxu0 0.0
    %651 = vmatprep.subr.mxu0 0.0
    %652 = vmatpush1.msra.mxu0 0.0
    %653 = vmatprep.subr.mxu0 0.0
    %654 = vmatpush1.msra.mxu0 0.0
    %655 = vmatprep.subr.mxu0 0.0
    %656 = vmatpush1.msra.mxu0 0.0
    %657 = vmatprep.subr.mxu0 0.0
    %658 = vmatpush1.msra.mxu0 0.0
    %659 = vmatprep.subr.mxu0 0.0
    %660 = vmatpush1.msra.mxu0 0.0
    %661 = vmatprep.subr.mxu0 0.0
    %662 = vmatpush1.msra.mxu0 0.0
    %663 = vmatprep.subr.mxu0 0.0
    %664 = vmatpush1.msra.mxu0 0.0
    %665 = vmatprep.subr.mxu0 0.0
    %666 = vmatpush1.msra.mxu0 0.0
    %667 = vmatprep.subr.mxu0 0.0
    %668 = vmatpush1.msra.mxu0 0.0
    %669 = vmatprep.subr.mxu0 0.0
    %670 = vmatpush1.msra.mxu0 0.0
    %671 = vmatprep.mubr.f32.mxu0 0.0
    %672 = vmatmul.mubr.f32.gmra.mrb[0].mxu0 %v535
    %v673 = vpop.f32.mrb[0].mxu0
    %v674 = vadd.f32 0.0, %v673
    %v675 = vpop.f32.mrb[0].mxu0
    %676 = vdwg.mxu0
    %v677 = vadd.f32 %v218, %v674
    %v678 = vxor.u32 %v677, 2147483648
    %v679 = vmul.f32 %v678, 1.442695
    %v680 = vpow.pop %v679
    %v681 = vadd.f32 %v680, 1.0
    %v682 = vrcp.pop %v681
    %v683 = vmul.f32 1.0, %v682
    %v684 = vtanh.pop %v677
    %685 = vrot.lane.b32.xlu0 %v683, 96
    %v686 = vpop.permute.xlu0 %685
    %687 = vrot.lane.b32.xlu0 %v684, 64
    %v688 = vpop.permute.xlu0 %687
    %689 = vrot.lane.b32.xlu0 %v683, 32
    %v690 = vpop.permute.xlu0 %689
    %v691 = vmul.f32 %v686, %v533
    %v692 = vmul.f32 %v683, %v688
    %v693 = vadd.f32 %v691, %v692
    %v694 = vtanh.pop %v693
    %v695 = vmul.f32 %v690, %v694
    %696 = vmatprep.subr.mxu0 0.0
    %697 = vmatpush1.msra.mxu0 %v262
    %698 = vmatprep.subr.mxu0 0.0
    %699 = vmatpush1.msra.mxu0 %v263
    %700 = vmatprep.subr.mxu0 0.0
    %701 = vmatpush1.msra.mxu0 %v264
    %702 = vmatprep.subr.mxu0 0.0
    %703 = vmatpush1.msra.mxu0 %v265
    %704 = vmatprep.subr.mxu0 0.0
    %705 = vmatpush1.msra.mxu0 %v266
    %706 = vmatprep.subr.mxu0 0.0
    %707 = vmatpush1.msra.mxu0 %v267
    %708 = vmatprep.subr.mxu0 0.0
    %709 = vmatpush1.msra.mxu0 %v268
    %710 = vmatprep.subr.mxu0 0.0
    %711 = vmatpush1.msra.mxu0 %v269
    %712 = vmatprep.subr.mxu0 0.0
    %713 = vmatpush1.msra.mxu0 %v270
    %714 = vmatprep.subr.mxu0 0.0
    %715 = vmatpush1.msra.mxu0 %v271
    %716 = vmatprep.subr.mxu0 0.0
    %717 = vmatpush1.msra.mxu0 %v272
    %718 = vmatprep.subr.mxu0 0.0
    %719 = vmatpush1.msra.mxu0 %v273
    %720 = vmatprep.subr.mxu0 0.0
    %721 = vmatpush1.msra.mxu0 %v274
    %722 = vmatprep.subr.mxu0 0.0
    %723 = vmatpush1.msra.mxu0 %v275
    %724 = vmatprep.subr.mxu0 0.0
    %725 = vmatpush1.msra.mxu0 %v276
    %726 = vmatprep.subr.mxu0 0.0
    %727 = vmatpush1.msra.mxu0 %v277
    %728 = vmatprep.subr.mxu0 0.0
    %729 = vmatpush1.msra.mxu0 0.0
    %730 = vmatprep.subr.mxu0 0.0
    %731 = vmatpush1.msra.mxu0 0.0
    %732 = vmatprep.subr.mxu0 0.0
    %733 = vmatpush1.msra.mxu0 0.0
    %734 = vmatprep.subr.mxu0 0.0
    %735 = vmatpush1.msra.mxu0 0.0
    %736 = vmatprep.subr.mxu0 0.0
    %737 = vmatpush1.msra.mxu0 0.0
    %738 = vmatprep.subr.mxu0 0.0
    %739 = vmatpush1.msra.mxu0 0.0
    %740 = vmatprep.subr.mxu0 0.0
    %741 = vmatpush1.msra.mxu0 0.0
    %742 = vmatprep.subr.mxu0 0.0
    %743 = vmatpush1.msra.mxu0 0.0
    %744 = vmatprep.subr.mxu0 0.0
    %745 = vmatpush1.msra.mxu0 0.0
    %746 = vmatprep.subr.mxu0 0.0
    %747 = vmatpush1.msra.mxu0 0.0
    %748 = vmatprep.subr.mxu0 0.0
    %749 = vmatpush1.msra.mxu0 0.0
    %750 = vmatprep.subr.mxu0 0.0
    %751 = vmatpush1.msra.mxu0 0.0
    %752 = vmatprep.subr.mxu0 0.0
    %753 = vmatpush1.msra.mxu0 0.0
    %754 = vmatprep.subr.mxu0 0.0
    %755 = vmatpush1.msra.mxu0 0.0
    %756 = vmatprep.subr.mxu0 0.0
    %757 = vmatpush1.msra.mxu0 0.0
    %758 = vmatprep.subr.mxu0 0.0
    %759 = vmatpush1.msra.mxu0 0.0
    %760 = vmatprep.mubr.f32.mxu0 0.0
    %761 = vmatmul.mubr.f32.gmra.mrb[0].mxu0 %v695
    %v762 = vpop.f32.mrb[0].mxu0
    %v763 = vadd.f32 %v374, %v762
    %v764 = vpop.f32.mrb[0].mxu0
    %765 = vdwg.mxu0
    %766 = vst [vmem:[%s8 + $0x10] sm:$0xff] %v763
    %767 = vmatprep.subr.mxu0 0.0
    %768 = vmatpush1.msra.mxu0 %v246
    %769 = vmatprep.subr.mxu0 0.0
    %770 = vmatpush1.msra.mxu0 %v247
    %771 = vmatprep.subr.mxu0 0.0
    %772 = vmatpush1.msra.mxu0 %v248
    %773 = vmatprep.subr.mxu0 0.0
    %774 = vmatpush1.msra.mxu0 %v249
    %775 = vmatprep.subr.mxu0 0.0
    %776 = vmatpush1.msra.mxu0 %v250
    %777 = vmatprep.subr.mxu0 0.0
    %778 = vmatpush1.msra.mxu0 %v251
    %779 = vmatprep.subr.mxu0 0.0
    %780 = vmatpush1.msra.mxu0 %v252
    %781 = vmatprep.subr.mxu0 0.0
    %782 = vmatpush1.msra.mxu0 %v253
    %783 = vmatprep.subr.mxu0 0.0
    %784 = vmatpush1.msra.mxu0 %v254
    %785 = vmatprep.subr.mxu0 0.0
    %786 = vmatpush1.msra.mxu0 %v255
    %787 = vmatprep.subr.mxu0 0.0
    %788 = vmatpush1.msra.mxu0 %v256
    %789 = vmatprep.subr.mxu0 0.0
    %790 = vmatpush1.msra.mxu0 %v257
    %791 = vmatprep.subr.mxu0 0.0
    %792 = vmatpush1.msra.mxu0 %v258
    %793 = vmatprep.subr.mxu0 0.0
    %794 = vmatpush1.msra.mxu0 %v259
    %795 = vmatprep.subr.mxu0 0.0
    %796 = vmatpush1.msra.mxu0 %v260
    %797 = vmatprep.subr.mxu0 0.0
    %798 = vmatpush1.msra.mxu0 %v261
    %799 = vmatprep.subr.mxu0 0.0
    %800 = vmatpush1.msra.mxu0 0.0
    %801 = vmatprep.subr.mxu0 0.0
    %802 = vmatpush1.msra.mxu0 0.0
    %803 = vmatprep.subr.mxu0 0.0
    %804 = vmatpush1.msra.mxu0 0.0
    %805 = vmatprep.subr.mxu0 0.0
    %806 = vmatpush1.msra.mxu0 0.0
    %807 = vmatprep.subr.mxu0 0.0
    %808 = vmatpush1.msra.mxu0 0.0
    %809 = vmatprep.subr.mxu0 0.0
    %810 = vmatpush1.msra.mxu0 0.0
    %811 = vmatprep.subr.mxu0 0.0
    %812 = vmatpush1.msra.mxu0 0.0
    %813 = vmatprep.subr.mxu0 0.0
    %814 = vmatpush1.msra.mxu0 0.0
    %815 = vmatprep.subr.mxu0 0.0
    %816 = vmatpush1.msra.mxu0 0.0
    %817 = vmatprep.subr.mxu0 0.0
    %818 = vmatpush1.msra.mxu0 0.0
    %819 = vmatprep.subr.mxu0 0.0
    %820 = vmatpush1.msra.mxu0 0.0
    %821 = vmatprep.subr.mxu0 0.0
    %822 = vmatpush1.msra.mxu0 0.0
    %823 = vmatprep.subr.mxu0 0.0
    %824 = vmatpush1.msra.mxu0 0.0
    %825 = vmatprep.subr.mxu0 0.0
    %826 = vmatpush1.msra.mxu0 0.0
    %827 = vmatprep.subr.mxu0 0.0
    %828 = vmatpush1.msra.mxu0 0.0
    %829 = vmatprep.subr.mxu0 0.0
    %830 = vmatpush1.msra.mxu0 0.0
    %831 = vmatprep.mubr.f32.mxu0 0.0
    %832 = vmatmul.mubr.f32.gmra.mrb[0].mxu0 %v695
    %v833 = vpop.f32.mrb[0].mxu0
    %v834 = vadd.f32 0.0, %v833
    %v835 = vpop.f32.mrb[0].mxu0
    %836 = vdwg.mxu0
    %v837 = vadd.f32 %v223, %v834
    %v838 = vxor.u32 %v837, 2147483648
    %v839 = vmul.f32 %v838, 1.442695
    %v840 = vpow.pop %v839
    %v841 = vadd.f32 %v840, 1.0
    %v842 = vrcp.pop %v841
    %v843 = vmul.f32 1.0, %v842
    %v844 = vtanh.pop %v837
    %845 = vrot.lane.b32.xlu0 %v843, 96
    %v846 = vpop.permute.xlu0 %845
    %847 = vrot.lane.b32.xlu0 %v844, 64
    %v848 = vpop.permute.xlu0 %847
    %849 = vrot.lane.b32.xlu0 %v843, 32
    %v850 = vpop.permute.xlu0 %849
    %v851 = vmul.f32 %v846, %v693
    %v852 = vmul.f32 %v843, %v848
    %v853 = vadd.f32 %v851, %v852
    %v854 = vtanh.pop %v853
    %v855 = vmul.f32 %v850, %v854
    %856 = vmatprep.subr.mxu0 0.0
    %857 = vmatpush1.msra.mxu0 %v262
    %858 = vmatprep.subr.mxu0 0.0
    %859 = vmatpush1.msra.mxu0 %v263
    %860 = vmatprep.subr.mxu0 0.0
    %861 = vmatpush1.msra.mxu0 %v264
    %862 = vmatprep.subr.mxu0 0.0
    %863 = vmatpush1.msra.mxu0 %v265
    %864 = vmatprep.subr.mxu0 0.0
    %865 = vmatpush1.msra.mxu0 %v266
    %866 = vmatprep.subr.mxu0 0.0
    %867 = vmatpush1.msra.mxu0 %v267
    %868 = vmatprep.subr.mxu0 0.0
    %869 = vmatpush1.msra.mxu0 %v268
    %870 = vmatprep.subr.mxu0 0.0
    %871 = vmatpush1.msra.mxu0 %v269
    %872 = vmatprep.subr.mxu0 0.0
    %873 = vmatpush1.msra.mxu0 %v270
    %874 = vmatprep.subr.mxu0 0.0
    %875 = vmatpush1.msra.mxu0 %v271
    %876 = vmatprep.subr.mxu0 0.0
    %877 = vmatpush1.msra.mxu0 %v272
    %878 = vmatprep.subr.mxu0 0.0
    %879 = vmatpush1.msra.mxu0 %v273
    %880 = vmatprep.subr.mxu0 0.0
    %881 = vmatpush1.msra.mxu0 %v274
    %882 = vmatprep.subr.mxu0 0.0
    %883 = vmatpush1.msra.mxu0 %v275
    %884 = vmatprep.subr.mxu0 0.0
    %885 = vmatpush1.msra.mxu0 %v276
    %886 = vmatprep.subr.mxu0 0.0
    %887 = vmatpush1.msra.mxu0 %v277
    %888 = vmatprep.subr.mxu0 0.0
    %889 = vmatpush1.msra.mxu0 0.0
    %890 = vmatprep.subr.mxu0 0.0
    %891 = vmatpush1.msra.mxu0 0.0
    %892 = vmatprep.subr.mxu0 0.0
    %893 = vmatpush1.msra.mxu0 0.0
    %894 = vmatprep.subr.mxu0 0.0
    %895 = vmatpush1.msra.mxu0 0.0
    %896 = vmatprep.subr.mxu0 0.0
    %897 = vmatpush1.msra.mxu0 0.0
    %898 = vmatprep.subr.mxu0 0.0
    %899 = vmatpush1.msra.mxu0 0.0
    %900 = vmatprep.subr.mxu0 0.0
    %901 = vmatpush1.msra.mxu0 0.0
    %902 = vmatprep.subr.mxu0 0.0
    %903 = vmatpush1.msra.mxu0 0.0
    %904 = vmatprep.subr.mxu0 0.0
    %905 = vmatpush1.msra.mxu0 0.0
    %906 = vmatprep.subr.mxu0 0.0
    %907 = vmatpush1.msra.mxu0 0.0
    %908 = vmatprep.subr.mxu0 0.0
    %909 = vmatpush1.msra.mxu0 0.0
    %910 = vmatprep.subr.mxu0 0.0
    %911 = vmatpush1.msra.mxu0 0.0
    %912 = vmatprep.subr.mxu0 0.0
    %913 = vmatpush1.msra.mxu0 0.0
    %914 = vmatprep.subr.mxu0 0.0
    %915 = vmatpush1.msra.mxu0 0.0
    %916 = vmatprep.subr.mxu0 0.0
    %917 = vmatpush1.msra.mxu0 0.0
    %918 = vmatprep.subr.mxu0 0.0
    %919 = vmatpush1.msra.mxu0 0.0
    %920 = vmatprep.mubr.f32.mxu0 0.0
    %921 = vmatmul.mubr.f32.gmra.mrb[0].mxu0 %v855
    %v922 = vpop.f32.mrb[0].mxu0
    %v923 = vadd.f32 %v374, %v922
    %v924 = vpop.f32.mrb[0].mxu0
    %925 = vdwg.mxu0
    %926 = vst [vmem:[%s8 + $0x18] sm:$0xff] %v923
    %927 = vmatprep.subr.mxu0 0.0
    %928 = vmatpush1.msra.mxu0 %v246
    %929 = vmatprep.subr.mxu0 0.0
    %930 = vmatpush1.msra.mxu0 %v247
    %931 = vmatprep.subr.mxu0 0.0
    %932 = vmatpush1.msra.mxu0 %v248
    %933 = vmatprep.subr.mxu0 0.0
    %934 = vmatpush1.msra.mxu0 %v249
    %935 = vmatprep.subr.mxu0 0.0
    %936 = vmatpush1.msra.mxu0 %v250
    %937 = vmatprep.subr.mxu0 0.0
    %938 = vmatpush1.msra.mxu0 %v251
    %939 = vmatprep.subr.mxu0 0.0
    %940 = vmatpush1.msra.mxu0 %v252
    %941 = vmatprep.subr.mxu0 0.0
    %942 = vmatpush1.msra.mxu0 %v253
    %943 = vmatprep.subr.mxu0 0.0
    %944 = vmatpush1.msra.mxu0 %v254
    %945 = vmatprep.subr.mxu0 0.0
    %946 = vmatpush1.msra.mxu0 %v255
    %947 = vmatprep.subr.mxu0 0.0
    %948 = vmatpush1.msra.mxu0 %v256
    %949 = vmatprep.subr.mxu0 0.0
    %950 = vmatpush1.msra.mxu0 %v257
    %951 = vmatprep.subr.mxu0 0.0
    %952 = vmatpush1.msra.mxu0 %v258
    %953 = vmatprep.subr.mxu0 0.0
    %954 = vmatpush1.msra.mxu0 %v259
    %955 = vmatprep.subr.mxu0 0.0
    %956 = vmatpush1.msra.mxu0 %v260
    %957 = vmatprep.subr.mxu0 0.0
    %958 = vmatpush1.msra.mxu0 %v261
    %959 = vmatprep.subr.mxu0 0.0
    %960 = vmatpush1.msra.mxu0 0.0
    %961 = vmatprep.subr.mxu0 0.0
    %962 = vmatpush1.msra.mxu0 0.0
    %963 = vmatprep.subr.mxu0 0.0
    %964 = vmatpush1.msra.mxu0 0.0
    %965 = vmatprep.subr.mxu0 0.0
    %966 = vmatpush1.msra.mxu0 0.0
    %967 = vmatprep.subr.mxu0 0.0
    %968 = vmatpush1.msra.mxu0 0.0
    %969 = vmatprep.subr.mxu0 0.0
    %970 = vmatpush1.msra.mxu0 0.0
    %971 = vmatprep.subr.mxu0 0.0
    %972 = vmatpush1.msra.mxu0 0.0
    %973 = vmatprep.subr.mxu0 0.0
    %974 = vmatpush1.msra.mxu0 0.0
    %975 = vmatprep.subr.mxu0 0.0
    %976 = vmatpush1.msra.mxu0 0.0
    %977 = vmatprep.subr.mxu0 0.0
    %978 = vmatpush1.msra.mxu0 0.0
    %979 = vmatprep.subr.mxu0 0.0
    %980 = vmatpush1.msra.mxu0 0.0
    %981 = vmatprep.subr.mxu0 0.0
    %982 = vmatpush1.msra.mxu0 0.0
    %983 = vmatprep.subr.mxu0 0.0
    %984 = vmatpush1.msra.mxu0 0.0
    %985 = vmatprep.subr.mxu0 0.0
    %986 = vmatpush1.msra.mxu0 0.0
    %987 = vmatprep.subr.mxu0 0.0
    %988 = vmatpush1.msra.mxu0 0.0
    %989 = vmatprep.subr.mxu0 0.0
    %990 = vmatpush1.msra.mxu0 0.0
    %991 = vmatprep.mubr.f32.mxu0 0.0
    %992 = vmatmul.mubr.f32.gmra.mrb[0].mxu0 %v855
    %v993 = vpop.f32.mrb[0].mxu0
    %v994 = vadd.f32 0.0, %v993
    %v995 = vpop.f32.mrb[0].mxu0
    %996 = vdwg.mxu0
    %v997 = vadd.f32 %v228, %v994
    %v998 = vxor.u32 %v997, 2147483648
    %v999 = vmul.f32 %v998, 1.442695
    %v1000 = vpow.pop %v999
    %v1001 = vadd.f32 %v1000, 1.0
    %v1002 = vrcp.pop %v1001
    %v1003 = vmul.f32 1.0, %v1002
    %v1004 = vtanh.pop %v997
    %1005 = vrot.lane.b32.xlu0 %v1003, 96
    %v1006 = vpop.permute.xlu0 %1005
    %1007 = vrot.lane.b32.xlu0 %v1004, 64
    %v1008 = vpop.permute.xlu0 %1007
    %1009 = vrot.lane.b32.xlu0 %v1003, 32
    %v1010 = vpop.permute.xlu0 %1009
    %v1011 = vmul.f32 %v1006, %v853
    %v1012 = vmul.f32 %v1003, %v1008
    %v1013 = vadd.f32 %v1011, %v1012
    %v1014 = vtanh.pop %v1013
    %v1015 = vmul.f32 %v1010, %v1014
    %1016 = vmatprep.subr.mxu0 0.0
    %1017 = vmatpush1.msra.mxu0 %v262
    %1018 = vmatprep.subr.mxu0 0.0
    %1019 = vmatpush1.msra.mxu0 %v263
    %1020 = vmatprep.subr.mxu0 0.0
    %1021 = vmatpush1.msra.mxu0 %v264
    %1022 = vmatprep.subr.mxu0 0.0
    %1023 = vmatpush1.msra.mxu0 %v265
    %1024 = vmatprep.subr.mxu0 0.0
    %1025 = vmatpush1.msra.mxu0 %v266
    %1026 = vmatprep.subr.mxu0 0.0
    %1027 = vmatpush1.msra.mxu0 %v267
    %1028 = vmatprep.subr.mxu0 0.0
    %1029 = vmatpush1.msra.mxu0 %v268
    %1030 = vmatprep.subr.mxu0 0.0
    %1031 = vmatpush1.msra.mxu0 %v269
    %1032 = vmatprep.subr.mxu0 0.0
    %1033 = vmatpush1.msra.mxu0 %v270
    %1034 = vmatprep.subr.mxu0 0.0
    %1035 = vmatpush1.msra.mxu0 %v271
    %1036 = vmatprep.subr.mxu0 0.0
    %1037 = vmatpush1.msra.mxu0 %v272
    %1038 = vmatprep.subr.mxu0 0.0
    %1039 = vmatpush1.msra.mxu0 %v273
    %1040 = vmatprep.subr.mxu0 0.0
    %1041 = vmatpush1.msra.mxu0 %v274
    %1042 = vmatprep.subr.mxu0 0.0
    %1043 = vmatpush1.msra.mxu0 %v275
    %1044 = vmatprep.subr.mxu0 0.0
    %1045 = vmatpush1.msra.mxu0 %v276
    %1046 = vmatprep.subr.mxu0 0.0
    %1047 = vmatpush1.msra.mxu0 %v277
    %1048 = vmatprep.subr.mxu0 0.0
    %1049 = vmatpush1.msra.mxu0 0.0
    %1050 = vmatprep.subr.mxu0 0.0
    %1051 = vmatpush1.msra.mxu0 0.0
    %1052 = vmatprep.subr.mxu0 0.0
    %1053 = vmatpush1.msra.mxu0 0.0
    %1054 = vmatprep.subr.mxu0 0.0
    %1055 = vmatpush1.msra.mxu0 0.0
    %1056 = vmatprep.subr.mxu0 0.0
    %1057 = vmatpush1.msra.mxu0 0.0
    %1058 = vmatprep.subr.mxu0 0.0
    %1059 = vmatpush1.msra.mxu0 0.0
    %1060 = vmatprep.subr.mxu0 0.0
    %1061 = vmatpush1.msra.mxu0 0.0
    %1062 = vmatprep.subr.mxu0 0.0
    %1063 = vmatpush1.msra.mxu0 0.0
    %1064 = vmatprep.subr.mxu0 0.0
    %1065 = vmatpush1.msra.mxu0 0.0
    %1066 = vmatprep.subr.mxu0 0.0
    %1067 = vmatpush1.msra.mxu0 0.0
    %1068 = vmatprep.subr.mxu0 0.0
    %1069 = vmatpush1.msra.mxu0 0.0
    %1070 = vmatprep.subr.mxu0 0.0
    %1071 = vmatpush1.msra.mxu0 0.0
    %1072 = vmatprep.subr.mxu0 0.0
    %1073 = vmatpush1.msra.mxu0 0.0
    %1074 = vmatprep.subr.mxu0 0.0
    %1075 = vmatpush1.msra.mxu0 0.0
    %1076 = vmatprep.subr.mxu0 0.0
    %1077 = vmatpush1.msra.mxu0 0.0
    %1078 = vmatprep.subr.mxu0 0.0
    %1079 = vmatpush1.msra.mxu0 0.0
    %1080 = vmatprep.mubr.f32.mxu0 0.0
    %1081 = vmatmul.mubr.f32.gmra.mrb[0].mxu0 %v1015
    %v1082 = vpop.f32.mrb[0].mxu0
    %v1083 = vadd.f32 %v374, %v1082
    %v1084 = vpop.f32.mrb[0].mxu0
    %1085 = vdwg.mxu0
    %1086 = vst [vmem:[%s8 + $0x20] sm:$0xff] %v1083
    %1087 = vmatprep.subr.mxu0 0.0
    %1088 = vmatpush1.msra.mxu0 %v246
    %1089 = vmatprep.subr.mxu0 0.0
    %1090 = vmatpush1.msra.mxu0 %v247
    %1091 = vmatprep.subr.mxu0 0.0
    %1092 = vmatpush1.msra.mxu0 %v248
    %1093 = vmatprep.subr.mxu0 0.0
    %1094 = vmatpush1.msra.mxu0 %v249
    %1095 = vmatprep.subr.mxu0 0.0
    %1096 = vmatpush1.msra.mxu0 %v250
    %1097 = vmatprep.subr.mxu0 0.0
    %1098 = vmatpush1.msra.mxu0 %v251
    %1099 = vmatprep.subr.mxu0 0.0
    %1100 = vmatpush1.msra.mxu0 %v252
    %1101 = vmatprep.subr.mxu0 0.0
    %1102 = vmatpush1.msra.mxu0 %v253
    %1103 = vmatprep.subr.mxu0 0.0
    %1104 = vmatpush1.msra.mxu0 %v254
    %1105 = vmatprep.subr.mxu0 0.0
    %1106 = vmatpush1.msra.mxu0 %v255
    %1107 = vmatprep.subr.mxu0 0.0
    %1108 = vmatpush1.msra.mxu0 %v256
    %1109 = vmatprep.subr.mxu0 0.0
    %1110 = vmatpush1.msra.mxu0 %v257
    %1111 = vmatprep.subr.mxu0 0.0
    %1112 = vmatpush1.msra.mxu0 %v258
    %1113 = vmatprep.subr.mxu0 0.0
    %1114 = vmatpush1.msra.mxu0 %v259
    %1115 = vmatprep.subr.mxu0 0.0
    %1116 = vmatpush1.msra.mxu0 %v260
    %1117 = vmatprep.subr.mxu0 0.0
    %1118 = vmatpush1.msra.mxu0 %v261
    %1119 = vmatprep.subr.mxu0 0.0
    %1120 = vmatpush1.msra.mxu0 0.0
    %1121 = vmatprep.subr.mxu0 0.0
    %1122 = vmatpush1.msra.mxu0 0.0
    %1123 = vmatprep.subr.mxu0 0.0
    %1124 = vmatpush1.msra.mxu0 0.0
    %1125 = vmatprep.subr.mxu0 0.0
    %1126 = vmatpush1.msra.mxu0 0.0
    %1127 = vmatprep.subr.mxu0 0.0
    %1128 = vmatpush1.msra.mxu0 0.0
    %1129 = vmatprep.subr.mxu0 0.0
    %1130 = vmatpush1.msra.mxu0 0.0
    %1131 = vmatprep.subr.mxu0 0.0
    %1132 = vmatpush1.msra.mxu0 0.0
    %1133 = vmatprep.subr.mxu0 0.0
    %1134 = vmatpush1.msra.mxu0 0.0
    %1135 = vmatprep.subr.mxu0 0.0
    %1136 = vmatpush1.msra.mxu0 0.0
    %1137 = vmatprep.subr.mxu0 0.0
    %1138 = vmatpush1.msra.mxu0 0.0
    %1139 = vmatprep.subr.mxu0 0.0
    %1140 = vmatpush1.msra.mxu0 0.0
    %1141 = vmatprep.subr.mxu0 0.0
    %1142 = vmatpush1.msra.mxu0 0.0
    %1143 = vmatprep.subr.mxu0 0.0
    %1144 = vmatpush1.msra.mxu0 0.0
    %1145 = vmatprep.subr.mxu0 0.0
    %1146 = vmatpush1.msra.mxu0 0.0
    %1147 = vmatprep.subr.mxu0 0.0
    %1148 = vmatpush1.msra.mxu0 0.0
    %1149 = vmatprep.subr.mxu0 0.0
    %1150 = vmatpush1.msra.mxu0 0.0
    %1151 = vmatprep.mubr.f32.mxu0 0.0
    %1152 = vmatmul.mubr.f32.gmra.mrb[0].mxu0 %v1015
    %v1153 = vpop.f32.mrb[0].mxu0
    %v1154 = vadd.f32 0.0, %v1153
    %v1155 = vpop.f32.mrb[0].mxu0
    %1156 = vdwg.mxu0
    %v1157 = vadd.f32 %v233, %v1154
    %v1158 = vxor.u32 %v1157, 2147483648
    %v1159 = vmul.f32 %v1158, 1.442695
    %v1160 = vpow.pop %v1159
    %v1161 = vadd.f32 %v1160, 1.0
    %v1162 = vrcp.pop %v1161
    %v1163 = vmul.f32 1.0, %v1162
    %v1164 = vtanh.pop %v1157
    %1165 = vrot.lane.b32.xlu0 %v1163, 96
    %v1166 = vpop.permute.xlu0 %1165
    %1167 = vrot.lane.b32.xlu0 %v1164, 64
    %v1168 = vpop.permute.xlu0 %1167
    %1169 = vrot.lane.b32.xlu0 %v1163, 32
    %v1170 = vpop.permute.xlu0 %1169
    %v1171 = vmul.f32 %v1166, %v1013
    %v1172 = vmul.f32 %v1163, %v1168
    %v1173 = vadd.f32 %v1171, %v1172
    %v1174 = vtanh.pop %v1173
    %v1175 = vmul.f32 %v1170, %v1174
    %1176 = vmatprep.subr.mxu0 0.0
    %1177 = vmatpush1.msra.mxu0 %v262
    %1178 = vmatprep.subr.mxu0 0.0
    %1179 = vmatpush1.msra.mxu0 %v263
    %1180 = vmatprep.subr.mxu0 0.0
    %1181 = vmatpush1.msra.mxu0 %v264
    %1182 = vmatprep.subr.mxu0 0.0
    %1183 = vmatpush1.msra.mxu0 %v265
    %1184 = vmatprep.subr.mxu0 0.0
    %1185 = vmatpush1.msra.mxu0 %v266
    %1186 = vmatprep.subr.mxu0 0.0
    %1187 = vmatpush1.msra.mxu0 %v267
    %1188 = vmatprep.subr.mxu0 0.0
    %1189 = vmatpush1.msra.mxu0 %v268
    %1190 = vmatprep.subr.mxu0 0.0
    %1191 = vmatpush1.msra.mxu0 %v269
    %1192 = vmatprep.subr.mxu0 0.0
    %1193 = vmatpush1.msra.mxu0 %v270
    %1194 = vmatprep.subr.mxu0 0.0
    %1195 = vmatpush1.msra.mxu0 %v271
    %1196 = vmatprep.subr.mxu0 0.0
    %1197 = vmatpush1.msra.mxu0 %v272
    %1198 = vmatprep.subr.mxu0 0.0
    %1199 = vmatpush1.msra.mxu0 %v273
    %1200 = vmatprep.subr.mxu0 0.0
    %1201 = vmatpush1.msra.mxu0 %v274
    %1202 = vmatprep.subr.mxu0 0.0
    %1203 = vmatpush1.msra.mxu0 %v275
    %1204 = vmatprep.subr.mxu0 0.0
    %1205 = vmatpush1.msra.mxu0 %v276
    %1206 = vmatprep.subr.mxu0 0.0
    %1207 = vmatpush1.msra.mxu0 %v277
    %1208 = vmatprep.subr.mxu0 0.0
    %1209 = vmatpush1.msra.mxu0 0.0
    %1210 = vmatprep.subr.mxu0 0.0
    %1211 = vmatpush1.msra.mxu0 0.0
    %1212 = vmatprep.subr.mxu0 0.0
    %1213 = vmatpush1.msra.mxu0 0.0
    %1214 = vmatprep.subr.mxu0 0.0
    %1215 = vmatpush1.msra.mxu0 0.0
    %1216 = vmatprep.subr.mxu0 0.0
    %1217 = vmatpush1.msra.mxu0 0.0
    %1218 = vmatprep.subr.mxu0 0.0
    %1219 = vmatpush1.msra.mxu0 0.0
    %1220 = vmatprep.subr.mxu0 0.0
    %1221 = vmatpush1.msra.mxu0 0.0
    %1222 = vmatprep.subr.mxu0 0.0
    %1223 = vmatpush1.msra.mxu0 0.0
    %1224 = vmatprep.subr.mxu0 0.0
    %1225 = vmatpush1.msra.mxu0 0.0
    %1226 = vmatprep.subr.mxu0 0.0
    %1227 = vmatpush1.msra.mxu0 0.0
    %1228 = vmatprep.subr.mxu0 0.0
    %1229 = vmatpush1.msra.mxu0 0.0
    %1230 = vmatprep.subr.mxu0 0.0
    %1231 = vmatpush1.msra.mxu0 0.0
    %1232 = vmatprep.subr.mxu0 0.0
    %1233 = vmatpush1.msra.mxu0 0.0
    %1234 = vmatprep.subr.mxu0 0.0
    %1235 = vmatpush1.msra.mxu0 0.0
    %1236 = vmatprep.subr.mxu0 0.0
    %1237 = vmatpush1.msra.mxu0 0.0
    %1238 = vmatprep.subr.mxu0 0.0
    %1239 = vmatpush1.msra.mxu0 0.0
    %1240 = vmatprep.mubr.f32.mxu0 0.0
    %1241 = vmatmul.mubr.f32.gmra.mrb[0].mxu0 %v1175
    %v1242 = vpop.f32.mrb[0].mxu0
    %v1243 = vadd.f32 %v374, %v1242
    %v1244 = vpop.f32.mrb[0].mxu0
    %1245 = vdwg.mxu0
    %1246 = vst [vmem:[%s8 + $0x28] sm:$0xff] %v1243
    %1247 = vmatprep.subr.mxu0 0.0
    %1248 = vmatpush1.msra.mxu0 %v246
    %1249 = vmatprep.subr.mxu0 0.0
    %1250 = vmatpush1.msra.mxu0 %v247
    %1251 = vmatprep.subr.mxu0 0.0
    %1252 = vmatpush1.msra.mxu0 %v248
    %1253 = vmatprep.subr.mxu0 0.0
    %1254 = vmatpush1.msra.mxu0 %v249
    %1255 = vmatprep.subr.mxu0 0.0
    %1256 = vmatpush1.msra.mxu0 %v250
    %1257 = vmatprep.subr.mxu0 0.0
    %1258 = vmatpush1.msra.mxu0 %v251
    %1259 = vmatprep.subr.mxu0 0.0
    %1260 = vmatpush1.msra.mxu0 %v252
    %1261 = vmatprep.subr.mxu0 0.0
    %1262 = vmatpush1.msra.mxu0 %v253
    %1263 = vmatprep.subr.mxu0 0.0
    %1264 = vmatpush1.msra.mxu0 %v254
    %1265 = vmatprep.subr.mxu0 0.0
    %1266 = vmatpush1.msra.mxu0 %v255
    %1267 = vmatprep.subr.mxu0 0.0
    %1268 = vmatpush1.msra.mxu0 %v256
    %1269 = vmatprep.subr.mxu0 0.0
    %1270 = vmatpush1.msra.mxu0 %v257
    %1271 = vmatprep.subr.mxu0 0.0
    %1272 = vmatpush1.msra.mxu0 %v258
    %1273 = vmatprep.subr.mxu0 0.0
    %1274 = vmatpush1.msra.mxu0 %v259
    %1275 = vmatprep.subr.mxu0 0.0
    %1276 = vmatpush1.msra.mxu0 %v260
    %1277 = vmatprep.subr.mxu0 0.0
    %1278 = vmatpush1.msra.mxu0 %v261
    %1279 = vmatprep.subr.mxu0 0.0
    %1280 = vmatpush1.msra.mxu0 0.0
    %1281 = vmatprep.subr.mxu0 0.0
    %1282 = vmatpush1.msra.mxu0 0.0
    %1283 = vmatprep.subr.mxu0 0.0
    %1284 = vmatpush1.msra.mxu0 0.0
    %1285 = vmatprep.subr.mxu0 0.0
    %1286 = vmatpush1.msra.mxu0 0.0
    %1287 = vmatprep.subr.mxu0 0.0
    %1288 = vmatpush1.msra.mxu0 0.0
    %1289 = vmatprep.subr.mxu0 0.0
    %1290 = vmatpush1.msra.mxu0 0.0
    %1291 = vmatprep.subr.mxu0 0.0
    %1292 = vmatpush1.msra.mxu0 0.0
    %1293 = vmatprep.subr.mxu0 0.0
    %1294 = vmatpush1.msra.mxu0 0.0
    %1295 = vmatprep.subr.mxu0 0.0
    %1296 = vmatpush1.msra.mxu0 0.0
    %1297 = vmatprep.subr.mxu0 0.0
    %1298 = vmatpush1.msra.mxu0 0.0
    %1299 = vmatprep.subr.mxu0 0.0
    %1300 = vmatpush1.msra.mxu0 0.0
    %1301 = vmatprep.subr.mxu0 0.0
    %1302 = vmatpush1.msra.mxu0 0.0
    %1303 = vmatprep.subr.mxu0 0.0
    %1304 = vmatpush1.msra.mxu0 0.0
    %1305 = vmatprep.subr.mxu0 0.0
    %1306 = vmatpush1.msra.mxu0 0.0
    %1307 = vmatprep.subr.mxu0 0.0
    %1308 = vmatpush1.msra.mxu0 0.0
    %1309 = vmatprep.subr.mxu0 0.0
    %1310 = vmatpush1.msra.mxu0 0.0
    %1311 = vmatprep.mubr.f32.mxu0 0.0
    %1312 = vmatmul.mubr.f32.gmra.mrb[0].mxu0 %v1175
    %v1313 = vpop.f32.mrb[0].mxu0
    %v1314 = vadd.f32 0.0, %v1313
    %v1315 = vpop.f32.mrb[0].mxu0
    %1316 = vdwg.mxu0
    %v1317 = vadd.f32 %v238, %v1314
    %v1318 = vxor.u32 %v1317, 2147483648
    %v1319 = vmul.f32 %v1318, 1.442695
    %v1320 = vpow.pop %v1319
    %v1321 = vadd.f32 %v1320, 1.0
    %v1322 = vrcp.pop %v1321
    %v1323 = vmul.f32 1.0, %v1322
    %v1324 = vtanh.pop %v1317
    %1325 = vrot.lane.b32.xlu0 %v1323, 96
    %v1326 = vpop.permute.xlu0 %1325
    %1327 = vrot.lane.b32.xlu0 %v1324, 64
    %v1328 = vpop.permute.xlu0 %1327
    %1329 = vrot.lane.b32.xlu0 %v1323, 32
    %v1330 = vpop.permute.xlu0 %1329
    %v1331 = vmul.f32 %v1326, %v1173
    %v1332 = vmul.f32 %v1323, %v1328
    %v1333 = vadd.f32 %v1331, %v1332
    %v1334 = vtanh.pop %v1333
    %v1335 = vmul.f32 %v1330, %v1334
    %1336 = vmatprep.subr.mxu0 0.0
    %1337 = vmatpush1.msra.mxu0 %v262
    %1338 = vmatprep.subr.mxu0 0.0
    %1339 = vmatpush1.msra.mxu0 %v263
    %1340 = vmatprep.subr.mxu0 0.0
    %1341 = vmatpush1.msra.mxu0 %v264
    %1342 = vmatprep.subr.mxu0 0.0
    %1343 = vmatpush1.msra.mxu0 %v265
    %1344 = vmatprep.subr.mxu0 0.0
    %1345 = vmatpush1.msra.mxu0 %v266
    %1346 = vmatprep.subr.mxu0 0.0
    %1347 = vmatpush1.msra.mxu0 %v267
    %1348 = vmatprep.subr.mxu0 0.0
    %1349 = vmatpush1.msra.mxu0 %v268
    %1350 = vmatprep.subr.mxu0 0.0
    %1351 = vmatpush1.msra.mxu0 %v269
    %1352 = vmatprep.subr.mxu0 0.0
    %1353 = vmatpush1.msra.mxu0 %v270
    %1354 = vmatprep.subr.mxu0 0.0
    %1355 = vmatpush1.msra.mxu0 %v271
    %1356 = vmatprep.subr.mxu0 0.0
    %1357 = vmatpush1.msra.mxu0 %v272
    %1358 = vmatprep.subr.mxu0 0.0
    %1359 = vmatpush1.msra.mxu0 %v273
    %1360 = vmatprep.subr.mxu0 0.0
    %1361 = vmatpush1.msra.mxu0 %v274
    %1362 = vmatprep.subr.mxu0 0.0
    %1363 = vmatpush1.msra.mxu0 %v275
    %1364 = vmatprep.subr.mxu0 0.0
    %1365 = vmatpush1.msra.mxu0 %v276
    %1366 = vmatprep.subr.mxu0 0.0
    %1367 = vmatpush1.msra.mxu0 %v277
    %1368 = vmatprep.subr.mxu0 0.0
    %1369 = vmatpush1.msra.mxu0 0.0
    %1370 = vmatprep.subr.mxu0 0.0
    %1371 = vmatpush1.msra.mxu0 0.0
    %1372 = vmatprep.subr.mxu0 0.0
    %1373 = vmatpush1.msra.mxu0 0.0
    %1374 = vmatprep.subr.mxu0 0.0
    %1375 = vmatpush1.msra.mxu0 0.0
    %1376 = vmatprep.subr.mxu0 0.0
    %1377 = vmatpush1.msra.mxu0 0.0
    %1378 = vmatprep.subr.mxu0 0.0
    %1379 = vmatpush1.msra.mxu0 0.0
    %1380 = vmatprep.subr.mxu0 0.0
    %1381 = vmatpush1.msra.mxu0 0.0
    %1382 = vmatprep.subr.mxu0 0.0
    %1383 = vmatpush1.msra.mxu0 0.0
    %1384 = vmatprep.subr.mxu0 0.0
    %1385 = vmatpush1.msra.mxu0 0.0
    %1386 = vmatprep.subr.mxu0 0.0
    %1387 = vmatpush1.msra.mxu0 0.0
    %1388 = vmatprep.subr.mxu0 0.0
    %1389 = vmatpush1.msra.mxu0 0.0
    %1390 = vmatprep.subr.mxu0 0.0
    %1391 = vmatpush1.msra.mxu0 0.0
    %1392 = vmatprep.subr.mxu0 0.0
    %1393 = vmatpush1.msra.mxu0 0.0
    %1394 = vmatprep.subr.mxu0 0.0
    %1395 = vmatpush1.msra.mxu0 0.0
    %1396 = vmatprep.subr.mxu0 0.0
    %1397 = vmatpush1.msra.mxu0 0.0
    %1398 = vmatprep.subr.mxu0 0.0
    %1399 = vmatpush1.msra.mxu0 0.0
    %1400 = vmatprep.mubr.f32.mxu0 0.0
    %1401 = vmatmul.mubr.f32.gmra.mrb[0].mxu0 %v1335
    %v1402 = vpop.f32.mrb[0].mxu0
    %v1403 = vadd.f32 %v374, %v1402
    %v1404 = vpop.f32.mrb[0].mxu0
    %1405 = vdwg.mxu0
    %1406 = vst [vmem:[%s8 + $0x30] sm:$0xff] %v1403
    %1407 = vmatprep.subr.mxu0 0.0
    %1408 = vmatpush1.msra.mxu0 %v246
    %1409 = vmatprep.subr.mxu0 0.0
    %1410 = vmatpush1.msra.mxu0 %v247
    %1411 = vmatprep.subr.mxu0 0.0
    %1412 = vmatpush1.msra.mxu0 %v248
    %1413 = vmatprep.subr.mxu0 0.0
    %1414 = vmatpush1.msra.mxu0 %v249
    %1415 = vmatprep.subr.mxu0 0.0
    %1416 = vmatpush1.msra.mxu0 %v250
    %1417 = vmatprep.subr.mxu0 0.0
    %1418 = vmatpush1.msra.mxu0 %v251
    %1419 = vmatprep.subr.mxu0 0.0
    %1420 = vmatpush1.msra.mxu0 %v252
    %1421 = vmatprep.subr.mxu0 0.0
    %1422 = vmatpush1.msra.mxu0 %v253
    %1423 = vmatprep.subr.mxu0 0.0
    %1424 = vmatpush1.msra.mxu0 %v254
    %1425 = vmatprep.subr.mxu0 0.0
    %1426 = vmatpush1.msra.mxu0 %v255
    %1427 = vmatprep.subr.mxu0 0.0
    %1428 = vmatpush1.msra.mxu0 %v256
    %1429 = vmatprep.subr.mxu0 0.0
    %1430 = vmatpush1.msra.mxu0 %v257
    %1431 = vmatprep.subr.mxu0 0.0
    %1432 = vmatpush1.msra.mxu0 %v258
    %1433 = vmatprep.subr.mxu0 0.0
    %1434 = vmatpush1.msra.mxu0 %v259
    %1435 = vmatprep.subr.mxu0 0.0
    %1436 = vmatpush1.msra.mxu0 %v260
    %1437 = vmatprep.subr.mxu0 0.0
    %1438 = vmatpush1.msra.mxu0 %v261
    %1439 = vmatprep.subr.mxu0 0.0
    %1440 = vmatpush1.msra.mxu0 0.0
    %1441 = vmatprep.subr.mxu0 0.0
    %1442 = vmatpush1.msra.mxu0 0.0
    %1443 = vmatprep.subr.mxu0 0.0
    %1444 = vmatpush1.msra.mxu0 0.0
    %1445 = vmatprep.subr.mxu0 0.0
    %1446 = vmatpush1.msra.mxu0 0.0
    %1447 = vmatprep.subr.mxu0 0.0
    %1448 = vmatpush1.msra.mxu0 0.0
    %1449 = vmatprep.subr.mxu0 0.0
    %1450 = vmatpush1.msra.mxu0 0.0
    %1451 = vmatprep.subr.mxu0 0.0
    %1452 = vmatpush1.msra.mxu0 0.0
    %1453 = vmatprep.subr.mxu0 0.0
    %1454 = vmatpush1.msra.mxu0 0.0
    %1455 = vmatprep.subr.mxu0 0.0
    %1456 = vmatpush1.msra.mxu0 0.0
    %1457 = vmatprep.subr.mxu0 0.0
    %1458 = vmatpush1.msra.mxu0 0.0
    %1459 = vmatprep.subr.mxu0 0.0
    %1460 = vmatpush1.msra.mxu0 0.0
    %1461 = vmatprep.subr.mxu0 0.0
    %1462 = vmatpush1.msra.mxu0 0.0
    %1463 = vmatprep.subr.mxu0 0.0
    %1464 = vmatpush1.msra.mxu0 0.0
    %1465 = vmatprep.subr.mxu0 0.0
    %1466 = vmatpush1.msra.mxu0 0.0
    %1467 = vmatprep.subr.mxu0 0.0
    %1468 = vmatpush1.msra.mxu0 0.0
    %1469 = vmatprep.subr.mxu0 0.0
    %1470 = vmatpush1.msra.mxu0 0.0
    %1471 = vmatprep.mubr.f32.mxu0 0.0
    %1472 = vmatmul.mubr.f32.gmra.mrb[0].mxu0 %v1335
    %v1473 = vpop.f32.mrb[0].mxu0
    %v1474 = vadd.f32 0.0, %v1473
    %v1475 = vpop.f32.mrb[0].mxu0
    %1476 = vdwg.mxu0
    %v1477 = vadd.f32 %v243, %v1474
    %v1478 = vxor.u32 %v1477, 2147483648
    %v1479 = vmul.f32 %v1478, 1.442695
    %v1480 = vpow.pop %v1479
    %v1481 = vadd.f32 %v1480, 1.0
    %v1482 = vrcp.pop %v1481
    %v1483 = vmul.f32 1.0, %v1482
    %v1484 = vtanh.pop %v1477
    %1485 = vrot.lane.b32.xlu0 %v1483, 96
    %v1486 = vpop.permute.xlu0 %1485
    %1487 = vrot.lane.b32.xlu0 %v1484, 64
    %v1488 = vpop.permute.xlu0 %1487
    %1489 = vrot.lane.b32.xlu0 %v1483, 32
    %v1490 = vpop.permute.xlu0 %1489
    %v1491 = vmul.f32 %v1486, %v1333
    %v1492 = vmul.f32 %v1483, %v1488
    %v1493 = vadd.f32 %v1491, %v1492
    %v1494 = vtanh.pop %v1493
    %v1495 = vmul.f32 %v1490, %v1494
    %1496 = vmatprep.subr.mxu0 0.0
    %1497 = vmatpush1.msra.mxu0 %v262
    %1498 = vmatprep.subr.mxu0 0.0
    %1499 = vmatpush1.msra.mxu0 %v263
    %1500 = vmatprep.subr.mxu0 0.0
    %1501 = vmatpush1.msra.mxu0 %v264
    %1502 = vmatprep.subr.mxu0 0.0
    %1503 = vmatpush1.msra.mxu0 %v265
    %1504 = vmatprep.subr.mxu0 0.0
    %1505 = vmatpush1.msra.mxu0 %v266
    %1506 = vmatprep.subr.mxu0 0.0
    %1507 = vmatpush1.msra.mxu0 %v267
    %1508 = vmatprep.subr.mxu0 0.0
    %1509 = vmatpush1.msra.mxu0 %v268
    %1510 = vmatprep.subr.mxu0 0.0
    %1511 = vmatpush1.msra.mxu0 %v269
    %1512 = vmatprep.subr.mxu0 0.0
    %1513 = vmatpush1.msra.mxu0 %v270
    %1514 = vmatprep.subr.mxu0 0.0
    %1515 = vmatpush1.msra.mxu0 %v271
    %1516 = vmatprep.subr.mxu0 0.0
    %1517 = vmatpush1.msra.mxu0 %v272
    %1518 = vmatprep.subr.mxu0 0.0
    %1519 = vmatpush1.msra.mxu0 %v273
    %1520 = vmatprep.subr.mxu0 0.0
    %1521 = vmatpush1.msra.mxu0 %v274
    %1522 = vmatprep.subr.mxu0 0.0
    %1523 = vmatpush1.msra.mxu0 %v275
    %1524 = vmatprep.subr.mxu0 0.0
    %1525 = vmatpush1.msra.mxu0 %v276
    %1526 = vmatprep.subr.mxu0 0.0
    %1527 = vmatpush1.msra.mxu0 %v277
    %1528 = vmatprep.subr.mxu0 0.0
    %1529 = vmatpush1.msra.mxu0 0.0
    %1530 = vmatprep.subr.mxu0 0.0
    %1531 = vmatpush1.msra.mxu0 0.0
    %1532 = vmatprep.subr.mxu0 0.0
    %1533 = vmatpush1.msra.mxu0 0.0
    %1534 = vmatprep.subr.mxu0 0.0
    %1535 = vmatpush1.msra.mxu0 0.0
    %1536 = vmatprep.subr.mxu0 0.0
    %1537 = vmatpush1.msra.mxu0 0.0
    %1538 = vmatprep.subr.mxu0 0.0
    %1539 = vmatpush1.msra.mxu0 0.0
    %1540 = vmatprep.subr.mxu0 0.0
    %1541 = vmatpush1.msra.mxu0 0.0
    %1542 = vmatprep.subr.mxu0 0.0
    %1543 = vmatpush1.msra.mxu0 0.0
    %1544 = vmatprep.subr.mxu0 0.0
    %1545 = vmatpush1.msra.mxu0 0.0
    %1546 = vmatprep.subr.mxu0 0.0
    %1547 = vmatpush1.msra.mxu0 0.0
    %1548 = vmatprep.subr.mxu0 0.0
    %1549 = vmatpush1.msra.mxu0 0.0
    %1550 = vmatprep.subr.mxu0 0.0
    %1551 = vmatpush1.msra.mxu0 0.0
    %1552 = vmatprep.subr.mxu0 0.0
    %1553 = vmatpush1.msra.mxu0 0.0
    %1554 = vmatprep.subr.mxu0 0.0
    %1555 = vmatpush1.msra.mxu0 0.0
    %1556 = vmatprep.subr.mxu0 0.0
    %1557 = vmatpush1.msra.mxu0 0.0
    %1558 = vmatprep.subr.mxu0 0.0
    %1559 = vmatpush1.msra.mxu0 0.0
    %1560 = vmatprep.mubr.f32.mxu0 0.0
    %1561 = vmatmul.mubr.f32.gmra.mrb[0].mxu0 %v1495
    %v1562 = vpop.f32.mrb[0].mxu0
    %v1563 = vadd.f32 %v374, %v1562
    %v1564 = vpop.f32.mrb[0].mxu0
    %1565 = vdwg.mxu0
    %1566 = vst [vmem:[%s8 + $0x38] sm:$0xff] %v1563
    %1567 = vst [vmem:[%s9] sm:$0xff] %v1495
    %1568 = vst [vmem:[%s10] sm:$0xff] %v1493
    // Predicated region
    $region42: #{_forward.1} parent=1 // pred_check
      _
    $region43: #{_forward.1} parent=1 // pred_check_branch
      %1570 = sbr.rel (0) target = $region45
    $region44: #{_forward.1} parent=1 // pred_region
      _
    $region45: #{_forward.1} parent=1 // pred_fallthru
      _
    // Predicated region
    $region46: #{_forward.1} parent=1 // pred_check
      _
    $region47: #{_forward.1} parent=1 // pred_check_branch
      %1572 = sbr.rel (0) target = $region49
    $region48: #{_forward.1} parent=1 // pred_region
      _
    $region49: #{_forward.1} parent=1 // pred_fallthru
      _
    // Predicated region
    $region50: #{_forward.1} parent=1 // pred_check
      _
    $region51: #{_forward.1} parent=1 // pred_check_branch
      %1574 = sbr.rel (0) target = $region53
    $region52: #{_forward.1} parent=1 // pred_region
      _
    $region53: #{_forward.1} parent=1 // pred_fallthru
      _
    // Predicated region
    $region54: #{_forward.1} parent=1 // pred_check
      _
    $region55: #{_forward.1} parent=1 // pred_check_branch
      %1576 = sbr.rel (0) target = $region57
    $region56: #{_forward.1} parent=1 // pred_region
      _
    $region57: #{_forward.1} parent=1 // pred_fallthru
      _
    // Predicated region
    $region58: #{_forward.1} parent=1 // pred_check
      _
    $region59: #{_forward.1} parent=1 // pred_check_branch
      %1578 = sbr.rel (0) target = $region61
    $region60: #{_forward.1} parent=1 // pred_region
      _
    $region61: #{_forward.1} parent=1 // pred_fallthru
      _
    // Predicated region
    $region62: #{_forward.1} parent=1 // pred_check
      _
    $region63: #{_forward.1} parent=1 // pred_check_branch
      %1580 = sbr.rel (0) target = $region65
    $region64: #{_forward.1} parent=1 // pred_region
      _
    $region65: #{_forward.1} parent=1 // pred_fallthru
      _
    %1581 = vsyncpa [#allocation3], 1
    %1582 = vsyncpa [#allocation5], 1

</llo_original>
